<compile_context>
chip_gen: v7x
topology: tpu7x:2x2x1
jax: 0.10.0
libtpu: 0.0.40
codegen_flags: <defaults>
</compile_context>

<pallas_src>
import functools
import math

import numpy as np
import jax
import jax.numpy as jnp
from jax.experimental import pallas as pl
from jax.experimental.pallas import tpu as pltpu

# ----------------------------- hyper-params (match module __init__) ----------
REG_WEIGHT = 5.0
IOU_WEIGHT = 3.0
CLS_WEIGHT = 1.0
CENTER_RADIUS = 2.5
STRIDES = (8, 16, 32)
N_ANCHORS = 1

VMEM_LIMIT_BYTES = 40 * 1024 * 1024   # < v7x's 64 MiB physical; plenty on v5e/v6e


def _choose_anchor_tiling(num_anchors, num_classes):
    """Lane tile for the anchor axis + the padded anchor count.

    * Big tiles (512-1024 lanes) reach ~85% of HBM roofline vs ~63% at 256, so we
      pad A up to a multiple of the tile (padded anchors are neutralised inside
      the kernel) instead of shrinking the tile to divide the raw anchor count.
    * For large class counts the (nc, tile) transcendental chain would spill the
      64-entry vreg file, so the tile is capped at 512 there.
    * Keep >=2 anchor tiles when the padded axis allows it so the v7x megacore
      has parallel grid steps to shard across its two TensorCores.
    """
    max_tile = 512 if num_classes >= 32 else 1024
    a128 = -(-num_anchors // 128) * 128
    tile = min(max_tile, a128)
    a_pad = -(-num_anchors // tile) * tile
    if a_pad // tile == 1 and tile % 256 == 0:
        tile //= 2          # a_pad stays a multiple of the halved tile -> 2 tiles
    return tile, a_pad


# ----------------------------- Pallas kernels --------------------------------
def _assign_kernel(gt_ref, gtoh_ref, gtv_ref, grid_ref, std_ref,
                   raw_ref, cls_ref, obj_ref,
                   box_ref, fg_ref, iou_ref, cost_ref,
                   *, center_radius, cls_weight, iou_weight):
    """Fused box decode + SimOTA geometry + cost for one (batch, anchor-tile)."""
    gt = gt_ref[0]                      # (G, 4)   cx, cy, w, h (pixels), pad rows sentinel
    valid = gtv_ref[0] > 0.5            # (G, 1)
    g = grid_ref[...]                   # (2, T)   anchor grid xy (padded lanes = -1e9)
    s = std_ref[...]                    # (1, T)   per-anchor stride (padded lanes = 1)
    raw = raw_ref[0]                    # (4, T)   raw box logits, lanes = anchors
    cls_l = cls_ref[0]                  # (nc, T)  cls logits
    obj_l = obj_ref[0]                  # (1, T)   obj logits

    # ---- fused box decode (channel-major, lanes = anchors) -------------------
    xy = (raw[0:2, :] + g) * s          # (2, T)   (x + grid) * stride
    wh = jnp.exp(raw[2:4, :]) * s       # (2, T)   exp(x) * stride
    box_ref[0, 0:2, :] = xy             # direct sub-stores: no sublane concat copy
    box_ref[0, 2:4, :] = wh

    ctr = g * s + 0.5 * s               # anchor centers, (2, T)
    cx, cy = ctr[0:1, :], ctr[1:2, :]
    gx, gy = gt[:, 0:1], gt[:, 1:2]
    gw, gh = gt[:, 2:3], gt[:, 3:4]

    # ---- in-box / in-center tests (reference semantics) ----------------------
    in_box = ((cx > gx - 0.5 * gw) & (cy > gy - 0.5 * gh) &
              (gx + 0.5 * gw > cx) & (gy + 0.5 * gh > cy)) & valid
    # NOTE: faithfully reproduces the reference quirk where the center-region
    # right/bottom bound equals the gt center (rb = lt + r*s == center).
    in_cen = ((cx > gx - center_radius * s) & (cy > gy - center_radius * s) &
              (gx > cx) & (gy > cy)) & valid
    in_both = (in_box & in_cen).astype(jnp.float32)                 # (G, T)
    fg_ref[0] = jnp.max((in_box | in_cen).astype(jnp.float32),
                        axis=0, keepdims=True)                       # (1, T)

    # ---- pairwise IoU (xywh boxes) -------------------------------------------
    px, py = xy[0:1, :], xy[1:2, :]
    pw, ph = wh[0:1, :], wh[1:2, :]
    ix1 = jnp.maximum(gx - 0.5 * gw, px - 0.5 * pw)
    iy1 = jnp.maximum(gy - 0.5 * gh, py - 0.5 * ph)
    ix2 = jnp.minimum(gx + 0.5 * gw, px + 0.5 * pw)
    iy2 = jnp.minimum(gy + 0.5 * gh, py + 0.5 * ph)
    overlap = ((ix1 < ix2) & (iy1 < iy2)).astype(jnp.float32)
    inter = (ix2 - ix1) * (iy2 - iy1) * overlap
    denom = gw * gh + pw * ph - inter + 1e-9                          # eps-guarded
    r = pl.reciprocal(denom, approx=True)                             # EUP divide ...
    r = r * (2.0 - denom * r)                # ... + one Newton step (~f32-exact)
    iou = inter * r
    iou_ref[0] = iou
    pair_iou_loss = -jnp.log(iou + 1e-8)

    # ---- pairwise class BCE as an MXU matmul (no (G, T, nc) broadcast) -------
    # NOTE(perf): on v6e/v7x this (nc, T) transcendental chain could run in bf16
    # (EUP/VPU issue roughly halves for large nc); kept f32 so the SimOTA cost
    # ordering matches the torch reference exactly.
    p = jnp.sqrt(jax.nn.sigmoid(cls_l) * jax.nn.sigmoid(obj_l))       # (nc, T)
    log_p = jnp.maximum(jnp.log(p), -100.0)                           # torch BCE clamp
    log_1p = jnp.maximum(jnp.log(1.0 - p), -100.0)
    diff = log_p - log_1p                                             # (nc, T)
    sum_log_1p = jnp.sum(log_1p, axis=0, keepdims=True)               # (1, T)  XLU
    t = gtoh_ref[0]                                                   # (G, nc) one-hot
    if cls_l.shape[0] >= 64:
        # Large-nc models: native bf16 MXU path (one-hot exact, diff clamped).
        mat = jnp.dot(t.astype(jnp.bfloat16), diff.astype(jnp.bfloat16),
                      preferred_element_type=jnp.float32)
    else:
        mat = jnp.dot(t, diff, preferred_element_type=jnp.float32)
    pair_cls_loss = -(mat + sum_log_1p)                               # (G, T)

    cost_ref[0] = (cls_weight * pair_cls_loss
                   + iou_weight * pair_iou_loss
                   + 100000.0 * (1.0 - in_both))


def _bce_logits_mean_kernel(x_ref, t_ref, o_ref):
    """BCEWithLogitsLoss(reduction='mean') over a lane-dense (B, A) slab."""
    x = x_ref[...]
    t = t_ref[...]
    loss = jnp.maximum(x, 0.0) - x * t + jnp.log(1.0 + jnp.exp(-jnp.abs(x)))
    o_ref[...] = jnp.reshape(jnp.sum(loss) * (1.0 / x.size), (1, 1))


# ----------------------------- kernel wrappers --------------------------------
def simota_assign(gt, gt_oh, gt_valid, grid_xy, strd, raw_box, cls_l, obj_l, *, tile):
    """One batched pallas_call: box decode + fg mask + pairwise IoU + SimOTA cost."""
    B, G, _ = gt.shape
    nc = gt_oh.shape[-1]
    A_pad = grid_xy.shape[-1]
    kernel = functools.partial(_assign_kernel, center_radius=CENTER_RADIUS,
                               cls_weight=CLS_WEIGHT, iou_weight=IOU_WEIGHT)
    return pl.pallas_call(
        kernel,
        out_shape=(jax.ShapeDtypeStruct((B, 4, A_pad), jnp.float32),    # decoded boxes
                   jax.ShapeDtypeStruct((B, 1, A_pad), jnp.float32),    # fg mask
                   jax.ShapeDtypeStruct((B, G, A_pad), jnp.float32),    # pairwise iou
                   jax.ShapeDtypeStruct((B, G, A_pad), jnp.float32)),   # SimOTA cost
        # Anchor-tile axis innermost: the gt/gt_oh/gt_valid block indices stay
        # constant across consecutive steps, so their DMAs are not re-issued.
        grid=(B, A_pad // tile),
        in_specs=[
            pl.BlockSpec((1, G, 4), lambda b, a: (b, 0, 0)),      # gt boxes
            pl.BlockSpec((1, G, nc), lambda b, a: (b, 0, 0)),     # gt one-hot
            pl.BlockSpec((1, G, 1), lambda b, a: (b, 0, 0)),      # gt validity
            pl.BlockSpec((2, tile), lambda b, a: (0, a)),         # anchor grid xy
            pl.BlockSpec((1, tile), lambda b, a: (0, a)),         # anchor strides
            pl.BlockSpec((1, 4, tile), lambda b, a: (b, 0, a)),   # raw box logits
            pl.BlockSpec((1, nc, tile), lambda b, a: (b, 0, a)),  # cls logits
            pl.BlockSpec((1, 1, tile), lambda b, a: (b, 0, a)),   # obj logits
        ],
        out_specs=(
            pl.BlockSpec((1, 4, tile), lambda b, a: (b, 0, a)),   # decoded boxes
            pl.BlockSpec((1, 1, tile), lambda b, a: (b, 0, a)),   # fg mask
            pl.BlockSpec((1, G, tile), lambda b, a: (b, 0, a)),   # pairwise iou
            pl.BlockSpec((1, G, tile), lambda b, a: (b, 0, a)),   # SimOTA cost
        ),
        compiler_params=pltpu.CompilerParams(
            dimension_semantics=("parallel", "parallel"),
            vmem_limit_bytes=VMEM_LIMIT_BYTES),
    )(gt, gt_oh, gt_valid, grid_xy, strd, raw_box, cls_l, obj_l)


def obj_bce_mean(obj_logits, obj_targets):
    """obj_logits/obj_targets: (B, A) lane-dense along anchors."""
    # TODO(synk): targets could be shipped H2D as int8 and cast in-kernel (minor).
    return pl.pallas_call(
        _bce_logits_mean_kernel,
        out_shape=jax.ShapeDtypeStruct((1, 1), jnp.float32),
    )(obj_logits, obj_targets)[0, 0]


# ----------------------------- plain-JAX helpers ------------------------------
def ciou_loss_mean(box1, box2, eps=1e-7):
    # TODO(synk): IOUlossV6 source is not in the reference file; this uses the
    # YOLOv6 IOUloss(iou_type='ciou', reduction='mean') definition (xywh boxes).
    b1x1, b1x2 = box1[:, 0] - box1[:, 2] / 2, box1[:, 0] + box1[:, 2] / 2
    b1y1, b1y2 = box1[:, 1] - box1[:, 3] / 2, box1[:, 1] + box1[:, 3] / 2
    b2x1, b2x2 = box2[:, 0] - box2[:, 2] / 2, box2[:, 0] + box2[:, 2] / 2
    b2y1, b2y2 = box2[:, 1] - box2[:, 3] / 2, box2[:, 1] + box2[:, 3] / 2
    inter = (jnp.clip(jnp.minimum(b1x2, b2x2) - jnp.maximum(b1x1, b2x1), 0)
             * jnp.clip(jnp.minimum(b1y2, b2y2) - jnp.maximum(b1y1, b2y1), 0))
    w1, h1 = b1x2 - b1x1, b1y2 - b1y1 + eps
    w2, h2 = b2x2 - b2x1, b2y2 - b2y1 + eps
    union = w1 * h1 + w2 * h2 - inter + eps
    iou = inter / union
    cw = jnp.maximum(b1x2, b2x2) - jnp.minimum(b1x1, b2x1)
    ch = jnp.maximum(b1y2, b2y2) - jnp.minimum(b1y1, b2y1)
    c2 = cw ** 2 + ch ** 2 + eps
    rho2 = ((b2x1 + b2x2 - b1x1 - b1x2) ** 2 +
            (b2y1 + b2y2 - b1y1 - b1y2) ** 2) / 4.0
    v = (4.0 / math.pi ** 2) * (jnp.arctan(w2 / h2) - jnp.arctan(w1 / h1)) ** 2
    alpha = v / (v - iou + (1.0 + eps))
    ciou = iou - (rho2 / c2 + v * alpha)
    return jnp.mean(1.0 - ciou)


def get_outputs_and_grids(outputs_list):
    """Flatten per-level heads; build anchor-major raw slab, channel-major kernel
    feed, and the anchor grid / stride tables (decode itself is fused in-kernel)."""
    flats, xy_list, stride_list = [], [], []
    for k, out in enumerate(outputs_list):
        B, na, H, W, C = out.shape
        Ak = na * H * W
        flats.append(out.astype(jnp.float32).reshape(B, Ak, C))
        yv, xv = np.meshgrid(np.arange(H), np.arange(W), indexing="ij")
        grid2 = np.stack([xv, yv], -1).reshape(-1, 2).astype(np.float32)   # (Ak, 2)
        xy_list.append(grid2)
        stride_list.append(np.full((Ak, 1), float(STRIDES[k]), np.float32))
    flat_all = jnp.concatenate(flats, axis=1)               # (B, A, C) anchor-major raw
    raw_cm = jnp.transpose(flat_all, (0, 2, 1))              # (B, C, A) kernel feed only
    xy_shift = np.concatenate(xy_list, 0)                    # (A, 2)
    strides_np = np.concatenate(stride_list, 0)               # (A, 1)
    return flat_all, raw_cm, xy_shift, strides_np


# ----------------------------- full forward -----------------------------------
def compute_loss(outputs_list, targets):
    num_classes = outputs_list[0].shape[-1] - 5
    flat_all, raw_cm, xy_shift, strides_np = get_outputs_and_grids(outputs_list)
    B, A, _ = flat_all.shape

    # ---- host-side target preparation (tiny) ---------------------------------
    tg = np.asarray(targets, np.float32)                     # (B, maxT, 5)
    num_targets_list = (tg.sum(axis=2) > 0).sum(axis=1)
    MAX_GT = int(max(8, -(-tg.shape[1] // 8) * 8))           # sublane-friendly

    gt_boxes = np.full((B, MAX_GT, 4), -1e9, np.float32)
    gt_boxes[..., 2:] = 0.0
    gt_oh = np.zeros((B, MAX_GT, num_classes), np.float32)
    gt_valid = np.zeros((B, MAX_GT, 1), np.float32)
    for b in range(B):
        n = int(num_targets_list[b])
        if n > 0:
            gt_boxes[b, :n] = tg[b, :n, 1:5]
            cls_ids = tg[b, :n, 0].astype(np.int64)
            gt_oh[b, np.arange(n), cls_ids] = 1.0
            gt_valid[b, :n, 0] = 1.0

    # ---- anchor geometry, padded to the chosen lane tile ---------------------
    tile, A_pad = _choose_anchor_tiling(A, num_classes)
    pad_a = A_pad - A
    grid_pad = np.full((2, A_pad), -1e9, np.float32)          # padded anchors never fg
    grid_pad[:, :A] = xy_shift.T
    std_pad = np.ones((1, A_pad), np.float32)
    std_pad[:, :A] = strides_np.T

    raw_box_dev = jnp.pad(raw_cm[:, :4, :], ((0, 0), (0, 0), (0, pad_a)))
    cls_dev = jnp.pad(raw_cm[:, 5:, :], ((0, 0), (0, 0), (0, pad_a)))
    obj_dev = jnp.pad(raw_cm[:, 4:5, :], ((0, 0), (0, 0), (0, pad_a)))

    # ---- ONE batched Pallas launch: decode + in-box/in-center + IoU + cost ----
    boxes_dev, fg_dev, iou_dev, cost_dev = simota_assign(
        jnp.asarray(gt_boxes), jnp.asarray(gt_oh), jnp.asarray(gt_valid),
        jnp.asarray(grid_pad), jnp.asarray(std_pad),
        raw_box_dev, cls_dev, obj_dev, tile=tile)

    # ---- single batched D2H, then numpy-only bookkeeping ---------------------
    # Fetch the anchor-major raw slab directly (no channel-major transpose
    # round-trip); only the small decoded-box slab needs a host transpose.
    fg_np, iou_np, cost_np, boxes_cm_np, raw_hw = jax.device_get(
        (fg_dev, iou_dev, cost_dev, boxes_dev, flat_all))
    boxes_hw = np.transpose(boxes_cm_np[:, :, :A], (0, 2, 1))  # (B, A, 4) decoded

    # TODO(synk): dynamic-k SimOTA matching has data-dependent shapes (per-gt topk
    # with dynamic k, boolean-mask compression); kept host-side in numpy, mirroring
    # the reference's @torch.no_grad() python loops.
    cls_t_list, reg_t_list, l1_t_list = [], [], []
    pred_box_fg, raw_box_fg, cls_logit_fg = [], [], []
    obj_t_rows = []
    num_fg_total = 0   # note: reference computes num_fg but its losses are plain means

    for b in range(B):
        n = int(num_targets_list[b])
        fg_row = np.zeros((A,), bool)
        if n > 0:
            fg_idx = np.where(fg_np[b, 0, :A] > 0.5)[0]
            Af = int(fg_idx.size)
            if Af > 0:
                ious = iou_np[b, :n][:, fg_idx]
                cost = cost_np[b, :n][:, fg_idx]
                gt_classes = tg[b, :n, 0].astype(np.int64)
                matching = np.zeros_like(cost, dtype=np.uint8)
                n_cand = min(10, Af)
                topk_ious = -np.sort(-ious, axis=1)[:, :n_cand]
                dynamic_ks = np.maximum(topk_ious.sum(1).astype(np.int32), 1)
                for g in range(n):
                    pos = np.argsort(cost[g], kind="stable")[: int(dynamic_ks[g])]
                    matching[g, pos] = 1
                anchor_matching_gt = matching.sum(0)
                if (anchor_matching_gt > 1).sum() > 0:
                    multi = anchor_matching_gt > 1
                    cost_argmin = np.argmin(cost[:, multi], axis=0)
                    matching[:, multi] = 0
                    matching[cost_argmin, multi] = 1
                fg_mask_inboxes = matching.sum(0) > 0
                num_fg_img = int(fg_mask_inboxes.sum())
                num_fg_total += num_fg_img
                fg_row[fg_idx] = fg_mask_inboxes
                if num_fg_img > 0:
                    matched_gt_inds = matching[:, fg_mask_inboxes].argmax(0)
                    gt_matched_classes = gt_classes[matched_gt_inds]
                    pred_ious = (matching * ious).sum(0)[fg_mask_inboxes]
                    cls_t = (np.eye(num_classes, dtype=np.float32)[gt_matched_classes]
                             * pred_ious[:, None]).astype(np.float32)
                    reg_t = tg[b, :n, 1:5][matched_gt_inds].astype(np.float32)
                    s_fg = strides_np[fg_row]                   # (nfg, 1)
                    xy_fg = xy_shift[fg_row]                    # (nfg, 2)
                    l1_t = np.zeros((num_fg_img, 4), np.float32)
                    l1_t[:, 0:2] = reg_t[:, 0:2] / s_fg - xy_fg
                    l1_t[:, 2:4] = np.log(reg_t[:, 2:4] / s_fg + 1e-8)
                    cls_t_list.append(cls_t)
                    reg_t_list.append(reg_t)
                    l1_t_list.append(l1_t)
                    pred_box_fg.append(boxes_hw[b][fg_row])
                    raw_box_fg.append(raw_hw[b][fg_row, :4])
                    cls_logit_fg.append(raw_hw[b][fg_row, 5:])
        obj_t_rows.append(fg_row.astype(np.float32))

    if num_fg_total > 0:
        cls_targets = np.concatenate(cls_t_list, 0)
        reg_targets = np.concatenate(reg_t_list, 0)
        l1_targets = np.concatenate(l1_t_list, 0)
        pred_fg = np.concatenate(pred_box_fg, 0)
        raw_fg = np.concatenate(raw_box_fg, 0)
        cls_fg_logits = np.concatenate(cls_logit_fg, 0)
    else:
        cls_targets = np.zeros((0, num_classes), np.float32)
        reg_targets = np.zeros((0, 4), np.float32)
        l1_targets = np.zeros((0, 4), np.float32)
        pred_fg = np.zeros((0, 4), np.float32)
        raw_fg = np.zeros((0, 4), np.float32)
        cls_fg_logits = np.zeros((0, num_classes), np.float32)

    # ---- final losses ---------------------------------------------------------
    loss_iou = REG_WEIGHT * ciou_loss_mean(jnp.asarray(pred_fg),
                                           jnp.asarray(reg_targets))
    loss_l1 = jnp.mean(jnp.abs(jnp.asarray(raw_fg) - jnp.asarray(l1_targets)))
    # Pallas: objectness BCE-with-logits over all (B, A) anchors (lane-dense).
    loss_obj = obj_bce_mean(raw_cm[:, 4, :],
                            jnp.asarray(np.stack(obj_t_rows, 0)))
    # CrossEntropyLoss with soft (probability) targets.
    logits = jnp.asarray(cls_fg_logits)
    loss_cls = jnp.mean(-jnp.sum(jnp.asarray(cls_targets)
                                 * jax.nn.log_softmax(logits, axis=-1), axis=-1))
    return loss_iou, loss_l1, loss_obj, loss_cls


# ----------------------------- demo -------------------------------------------
if __name__ == "__main__":
    key = jax.random.PRNGKey(0)
    B = 2
    num_classes = 3
    C = 5 + num_classes
    feat_sizes = [(8, 8), (4, 4), (2, 2)]   # 64x64 image, strides 8 / 16 / 32

    outputs = []
    for (h, w) in feat_sizes:
        key, sub = jax.random.split(key)
        outputs.append(0.5 * jax.random.normal(sub, (B, N_ANCHORS, h, w, C),
                                               jnp.float32))

    # targets: (B, max_gt, 5) = [class, cx, cy, w, h] in pixels, zero-padded rows
    targets_np = np.zeros((B, 3, 5), np.float32)
    targets_np[0, 0] = [1.0, 20.0, 20.0, 16.0, 16.0]
    targets_np[0, 1] = [2.0, 44.0, 36.0, 24.0, 20.0]
    targets_np[1, 0] = [0.0, 32.0, 32.0, 30.0, 28.0]
    targets = jnp.asarray(targets_np)

    losses = compute_loss(outputs, targets)
    losses = jax.block_until_ready(jnp.stack(list(losses)))
    assert np.all(np.isfinite(np.asarray(losses)))
    print("KERNEL_OK")
</pallas_src>

<mosaic_0001>
module attributes {stable_mosaic.version = 11 : i64} {
  func.func @_assign_kernel(%arg0: i32, %arg1: i32, %arg2: memref<1x8x4xf32, #tpu.memory_space<vmem>>, %arg3: memref<1x8x3xf32, #tpu.memory_space<vmem>>, %arg4: memref<1x8x1xf32, #tpu.memory_space<vmem>>, %arg5: memref<2x128xf32, #tpu.memory_space<vmem>>, %arg6: memref<1x128xf32, #tpu.memory_space<vmem>>, %arg7: memref<1x4x128xf32, #tpu.memory_space<vmem>>, %arg8: memref<1x3x128xf32, #tpu.memory_space<vmem>>, %arg9: memref<1x1x128xf32, #tpu.memory_space<vmem>>, %arg10: memref<1x4x128xf32, #tpu.memory_space<vmem>>, %arg11: memref<1x1x128xf32, #tpu.memory_space<vmem>>, %arg12: memref<1x8x128xf32, #tpu.memory_space<vmem>>, %arg13: memref<1x8x128xf32, #tpu.memory_space<vmem>>) attributes {dimension_semantics = [#tpu.dimension_semantics<parallel>, #tpu.dimension_semantics<parallel>], iteration_bounds = array<i64: 2, 1>, scalar_prefetch = 0 : i64, scratch_operands = 0 : i64, tpu.core_type = #tpu.core_type<tc>, window_params = [{transform_indices = @transform_0, window_bounds = array<i64: 1, 8, 4>}, {transform_indices = @transform_1, window_bounds = array<i64: 1, 8, 3>}, {transform_indices = @transform_2, window_bounds = array<i64: 1, 8, 1>}, {transform_indices = @transform_3, window_bounds = array<i64: 2, 128>}, {transform_indices = @transform_4, window_bounds = array<i64: 1, 128>}, {transform_indices = @transform_5, window_bounds = array<i64: 1, 4, 128>}, {transform_indices = @transform_6, window_bounds = array<i64: 1, 3, 128>}, {transform_indices = @transform_7, window_bounds = array<i64: 1, 1, 128>}, {transform_indices = @transform_8, window_bounds = array<i64: 1, 4, 128>}, {transform_indices = @transform_9, window_bounds = array<i64: 1, 1, 128>}, {transform_indices = @transform_10, window_bounds = array<i64: 1, 8, 128>}, {transform_indices = @transform_11, window_bounds = array<i64: 1, 8, 128>}]} {
    %c0 = arith.constant 0 : index
    %c0_0 = arith.constant 0 : index
    %c0_1 = arith.constant 0 : index
    %0 = vector.load %arg2[%c0, %c0_0, %c0_1] : memref<1x8x4xf32, #tpu.memory_space<vmem>>, vector<1x8x4xf32>
    %1 = vector.shape_cast %0 : vector<1x8x4xf32> to vector<8x4xf32>
    %c0_2 = arith.constant 0 : index
    %c0_3 = arith.constant 0 : index
    %c0_4 = arith.constant 0 : index
    %2 = vector.load %arg4[%c0_2, %c0_3, %c0_4] : memref<1x8x1xf32, #tpu.memory_space<vmem>>, vector<1x8x1xf32>
    %3 = vector.shape_cast %2 : vector<1x8x1xf32> to vector<8x1xf32>
    %cst = arith.constant 5.000000e-01 : f32
    %4 = vector.broadcast %cst : f32 to vector<8x1xf32>
    %5 = arith.cmpf ogt, %3, %4 : vector<8x1xf32>
    %c0_5 = arith.constant 0 : index
    %c0_6 = arith.constant 0 : index
    %6 = vector.load %arg5[%c0_5, %c0_6] : memref<2x128xf32, #tpu.memory_space<vmem>>, vector<2x128xf32>
    %c0_7 = arith.constant 0 : index
    %c0_8 = arith.constant 0 : index
    %7 = vector.load %arg6[%c0_7, %c0_8] : memref<1x128xf32, #tpu.memory_space<vmem>>, vector<1x128xf32>
    %c0_9 = arith.constant 0 : index
    %c0_10 = arith.constant 0 : index
    %c0_11 = arith.constant 0 : index
    %8 = vector.load %arg7[%c0_9, %c0_10, %c0_11] : memref<1x4x128xf32, #tpu.memory_space<vmem>>, vector<1x4x128xf32>
    %9 = vector.shape_cast %8 : vector<1x4x128xf32> to vector<4x128xf32>
    %c0_12 = arith.constant 0 : index
    %c0_13 = arith.constant 0 : index
    %c0_14 = arith.constant 0 : index
    %10 = vector.load %arg8[%c0_12, %c0_13, %c0_14] : memref<1x3x128xf32, #tpu.memory_space<vmem>>, vector<1x3x128xf32>
    %11 = vector.shape_cast %10 : vector<1x3x128xf32> to vector<3x128xf32>
    %c0_15 = arith.constant 0 : index
    %c0_16 = arith.constant 0 : index
    %c0_17 = arith.constant 0 : index
    %12 = vector.load %arg9[%c0_15, %c0_16, %c0_17] : memref<1x1x128xf32, #tpu.memory_space<vmem>>, vector<1x1x128xf32>
    %13 = vector.shape_cast %12 : vector<1x1x128xf32> to vector<1x128xf32>
    %14 = vector.extract_strided_slice %9 {offsets = [0, 0], sizes = [2, 128], strides = [1, 1]} : vector<4x128xf32> to vector<2x128xf32>
    %15 = arith.addf %14, %6 : vector<2x128xf32>
    %16 = vector.broadcast %7 : vector<1x128xf32> to vector<2x128xf32>
    %17 = arith.mulf %15, %16 : vector<2x128xf32>
    %18 = vector.extract_strided_slice %9 {offsets = [2, 0], sizes = [2, 128], strides = [1, 1]} : vector<4x128xf32> to vector<2x128xf32>
    %19 = math.exp %18 : vector<2x128xf32>
    %20 = vector.broadcast %7 : vector<1x128xf32> to vector<2x128xf32>
    %21 = arith.mulf %19, %20 : vector<2x128xf32>
    %c0_18 = arith.constant 0 : index
    %c0_19 = arith.constant 0 : index
    %c0_20 = arith.constant 0 : index
    %22 = vector.load %arg10[%c0_18, %c0_19, %c0_20] : memref<1x4x128xf32, #tpu.memory_space<vmem>>, vector<1x2x128xf32>
    %23 = vector.shape_cast %22 : vector<1x2x128xf32> to vector<2x128xf32>
    %24 = vector.shape_cast %17 : vector<2x128xf32> to vector<1x2x128xf32>
    tpu.vector_store %arg10[%c0_18, %c0_19, %c0_20], %24 {strides = array<i32>} : memref<1x4x128xf32, #tpu.memory_space<vmem>>, vector<1x2x128xf32>,
    %c0_21 = arith.constant 0 : index
    %c2 = arith.constant 2 : index
    %c0_22 = arith.constant 0 : index
    %25 = vector.load %arg10[%c0_21, %c2, %c0_22] : memref<1x4x128xf32, #tpu.memory_space<vmem>>, vector<1x2x128xf32>
    %26 = vector.shape_cast %25 : vector<1x2x128xf32> to vector<2x128xf32>
    %27 = vector.shape_cast %21 : vector<2x128xf32> to vector<1x2x128xf32>
    tpu.vector_store %arg10[%c0_21, %c2, %c0_22], %27 {strides = array<i32>} : memref<1x4x128xf32, #tpu.memory_space<vmem>>, vector<1x2x128xf32>,
    %28 = vector.broadcast %7 : vector<1x128xf32> to vector<2x128xf32>
    %29 = arith.mulf %6, %28 : vector<2x128xf32>
    %cst_23 = arith.constant 5.000000e-01 : f32
    %30 = vector.broadcast %cst_23 : f32 to vector<1x128xf32>
    %31 = arith.mulf %30, %7 : vector<1x128xf32>
    %32 = vector.broadcast %31 : vector<1x128xf32> to vector<2x128xf32>
    %33 = arith.addf %29, %32 : vector<2x128xf32>
    %34 = vector.extract_strided_slice %33 {offsets = [0, 0], sizes = [1, 128], strides = [1, 1]} : vector<2x128xf32> to vector<1x128xf32>
    %35 = vector.extract_strided_slice %33 {offsets = [1, 0], sizes = [1, 128], strides = [1, 1]} : vector<2x128xf32> to vector<1x128xf32>
    %36 = vector.extract_strided_slice %1 {offsets = [0, 0], sizes = [8, 1], strides = [1, 1]} : vector<8x4xf32> to vector<8x1xf32>
    %37 = vector.extract_strided_slice %1 {offsets = [0, 1], sizes = [8, 1], strides = [1, 1]} : vector<8x4xf32> to vector<8x1xf32>
    %38 = vector.extract_strided_slice %1 {offsets = [0, 2], sizes = [8, 1], strides = [1, 1]} : vector<8x4xf32> to vector<8x1xf32>
    %39 = vector.extract_strided_slice %1 {offsets = [0, 3], sizes = [8, 1], strides = [1, 1]} : vector<8x4xf32> to vector<8x1xf32>
    %cst_24 = arith.constant 5.000000e-01 : f32
    %40 = vector.broadcast %cst_24 : f32 to vector<8x1xf32>
    %41 = arith.mulf %40, %38 : vector<8x1xf32>
    %42 = arith.subf %36, %41 : vector<8x1xf32>
    %43 = vector.broadcast %34 : vector<1x128xf32> to vector<8x128xf32>
    %44 = vector.broadcast %42 : vector<8x1xf32> to vector<8x128xf32>
    %45 = arith.cmpf ogt, %43, %44 : vector<8x128xf32>
    %cst_25 = arith.constant 5.000000e-01 : f32
    %46 = vector.broadcast %cst_25 : f32 to vector<8x1xf32>
    %47 = arith.mulf %46, %39 : vector<8x1xf32>
    %48 = arith.subf %37, %47 : vector<8x1xf32>
    %49 = vector.broadcast %35 : vector<1x128xf32> to vector<8x128xf32>
    %50 = vector.broadcast %48 : vector<8x1xf32> to vector<8x128xf32>
    %51 = arith.cmpf ogt, %49, %50 : vector<8x128xf32>
    %52 = arith.andi %45, %51 : vector<8x128xi1>
    %cst_26 = arith.constant 5.000000e-01 : f32
    %53 = vector.broadcast %cst_26 : f32 to vector<8x1xf32>
    %54 = arith.mulf %53, %38 : vector<8x1xf32>
    %55 = arith.addf %36, %54 : vector<8x1xf32>
    %56 = vector.broadcast %55 : vector<8x1xf32> to vector<8x128xf32>
    %57 = vector.broadcast %34 : vector<1x128xf32> to vector<8x128xf32>
    %58 = arith.cmpf ogt, %56, %57 : vector<8x128xf32>
    %59 = arith.andi %52, %58 : vector<8x128xi1>
    %cst_27 = arith.constant 5.000000e-01 : f32
    %60 = vector.broadcast %cst_27 : f32 to vector<8x1xf32>
    %61 = arith.mulf %60, %39 : vector<8x1xf32>
    %62 = arith.addf %37, %61 : vector<8x1xf32>
    %63 = vector.broadcast %62 : vector<8x1xf32> to vector<8x128xf32>
    %64 = vector.broadcast %35 : vector<1x128xf32> to vector<8x128xf32>
    %65 = arith.cmpf ogt, %63, %64 : vector<8x128xf32>
    %66 = arith.andi %59, %65 : vector<8x128xi1>
    %67 = vector.broadcast %5 : vector<8x1xi1> to vector<8x128xi1>
    %68 = arith.andi %66, %67 : vector<8x128xi1>
    %cst_28 = arith.constant 2.500000e+00 : f32
    %69 = vector.broadcast %cst_28 : f32 to vector<1x128xf32>
    %70 = arith.mulf %69, %7 : vector<1x128xf32>
    %71 = vector.broadcast %36 : vector<8x1xf32> to vector<8x128xf32>
    %72 = vector.broadcast %70 : vector<1x128xf32> to vector<8x128xf32>
    %73 = arith.subf %71, %72 : vector<8x128xf32>
    %74 = vector.broadcast %34 : vector<1x128xf32> to vector<8x128xf32>
    %75 = arith.cmpf ogt, %74, %73 : vector<8x128xf32>
    %cst_29 = arith.constant 2.500000e+00 : f32
    %76 = vector.broadcast %cst_29 : f32 to vector<1x128xf32>
    %77 = arith.mulf %76, %7 : vector<1x128xf32>
    %78 = vector.broadcast %37 : vector<8x1xf32> to vector<8x128xf32>
    %79 = vector.broadcast %77 : vector<1x128xf32> to vector<8x128xf32>
    %80 = arith.subf %78, %79 : vector<8x128xf32>
    %81 = vector.broadcast %35 : vector<1x128xf32> to vector<8x128xf32>
    %82 = arith.cmpf ogt, %81, %80 : vector<8x128xf32>
    %83 = arith.andi %75, %82 : vector<8x128xi1>
    %84 = vector.broadcast %36 : vector<8x1xf32> to vector<8x128xf32>
    %85 = vector.broadcast %34 : vector<1x128xf32> to vector<8x128xf32>
    %86 = arith.cmpf ogt, %84, %85 : vector<8x128xf32>
    %87 = arith.andi %83, %86 : vector<8x128xi1>
    %88 = vector.broadcast %37 : vector<8x1xf32> to vector<8x128xf32>
    %89 = vector.broadcast %35 : vector<1x128xf32> to vector<8x128xf32>
    %90 = arith.cmpf ogt, %88, %89 : vector<8x128xf32>
    %91 = arith.andi %87, %90 : vector<8x128xi1>
    %92 = vector.broadcast %5 : vector<8x1xi1> to vector<8x128xi1>
    %93 = arith.andi %91, %92 : vector<8x128xi1>
    %94 = arith.andi %68, %93 : vector<8x128xi1>
    %95 = arith.extui %94 : vector<8x128xi1> to vector<8x128xi32>
    %96 = arith.sitofp %95 : vector<8x128xi32> to vector<8x128xf32>
    %97 = arith.ori %68, %93 : vector<8x128xi1>
    %98 = arith.extui %97 : vector<8x128xi1> to vector<8x128xi32>
    %99 = arith.sitofp %98 : vector<8x128xi32> to vector<8x128xf32>
    %cst_30 = arith.constant dense<0xFF800000> : vector<128xf32>
    %100 = vector.multi_reduction <maximumf>, %99, %cst_30 [0] : vector<8x128xf32> to vector<128xf32>
    %101 = vector.shape_cast %100 : vector<128xf32> to vector<1x128xf32>
    %c0_31 = arith.constant 0 : index
    %c0_32 = arith.constant 0 : index
    %c0_33 = arith.constant 0 : index
    %102 = vector.load %arg11[%c0_31, %c0_32, %c0_33] : memref<1x1x128xf32, #tpu.memory_space<vmem>>, vector<1x1x128xf32>
    %103 = vector.shape_cast %102 : vector<1x1x128xf32> to vector<1x128xf32>
    %104 = vector.shape_cast %101 : vector<1x128xf32> to vector<1x1x128xf32>
    tpu.vector_store %arg11[%c0_31, %c0_32, %c0_33], %104 {strides = array<i32>} : memref<1x1x128xf32, #tpu.memory_space<vmem>>, vector<1x1x128xf32>,
    %105 = vector.extract_strided_slice %17 {offsets = [0, 0], sizes = [1, 128], strides = [1, 1]} : vector<2x128xf32> to vector<1x128xf32>
    %106 = vector.extract_strided_slice %17 {offsets = [1, 0], sizes = [1, 128], strides = [1, 1]} : vector<2x128xf32> to vector<1x128xf32>
    %107 = vector.extract_strided_slice %21 {offsets = [0, 0], sizes = [1, 128], strides = [1, 1]} : vector<2x128xf32> to vector<1x128xf32>
    %108 = vector.extract_strided_slice %21 {offsets = [1, 0], sizes = [1, 128], strides = [1, 1]} : vector<2x128xf32> to vector<1x128xf32>
    %cst_34 = arith.constant 5.000000e-01 : f32
    %109 = vector.broadcast %cst_34 : f32 to vector<8x1xf32>
    %110 = arith.mulf %109, %38 : vector<8x1xf32>
    %111 = arith.subf %36, %110 : vector<8x1xf32>
    %cst_35 = arith.constant 5.000000e-01 : f32
    %112 = vector.broadcast %cst_35 : f32 to vector<1x128xf32>
    %113 = arith.mulf %112, %107 : vector<1x128xf32>
    %114 = arith.subf %105, %113 : vector<1x128xf32>
    %115 = vector.broadcast %111 : vector<8x1xf32> to vector<8x128xf32>
    %116 = vector.broadcast %114 : vector<1x128xf32> to vector<8x128xf32>
    %117 = arith.maximumf %115, %116 : vector<8x128xf32>
    %cst_36 = arith.constant 5.000000e-01 : f32
    %118 = vector.broadcast %cst_36 : f32 to vector<8x1xf32>
    %119 = arith.mulf %118, %39 : vector<8x1xf32>
    %120 = arith.subf %37, %119 : vector<8x1xf32>
    %cst_37 = arith.constant 5.000000e-01 : f32
    %121 = vector.broadcast %cst_37 : f32 to vector<1x128xf32>
    %122 = arith.mulf %121, %108 : vector<1x128xf32>
    %123 = arith.subf %106, %122 : vector<1x128xf32>
    %124 = vector.broadcast %120 : vector<8x1xf32> to vector<8x128xf32>
    %125 = vector.broadcast %123 : vector<1x128xf32> to vector<8x128xf32>
    %126 = arith.maximumf %124, %125 : vector<8x128xf32>
    %cst_38 = arith.constant 5.000000e-01 : f32
    %127 = vector.broadcast %cst_38 : f32 to vector<8x1xf32>
    %128 = arith.mulf %127, %38 : vector<8x1xf32>
    %129 = arith.addf %36, %128 : vector<8x1xf32>
    %cst_39 = arith.constant 5.000000e-01 : f32
    %130 = vector.broadcast %cst_39 : f32 to vector<1x128xf32>
    %131 = arith.mulf %130, %107 : vector<1x128xf32>
    %132 = arith.addf %105, %131 : vector<1x128xf32>
    %133 = vector.broadcast %129 : vector<8x1xf32> to vector<8x128xf32>
    %134 = vector.broadcast %132 : vector<1x128xf32> to vector<8x128xf32>
    %135 = arith.minimumf %133, %134 : vector<8x128xf32>
    %cst_40 = arith.constant 5.000000e-01 : f32
    %136 = vector.broadcast %cst_40 : f32 to vector<8x1xf32>
    %137 = arith.mulf %136, %39 : vector<8x1xf32>
    %138 = arith.addf %37, %137 : vector<8x1xf32>
    %cst_41 = arith.constant 5.000000e-01 : f32
    %139 = vector.broadcast %cst_41 : f32 to vector<1x128xf32>
    %140 = arith.mulf %139, %108 : vector<1x128xf32>
    %141 = arith.addf %106, %140 : vector<1x128xf32>
    %142 = vector.broadcast %138 : vector<8x1xf32> to vector<8x128xf32>
    %143 = vector.broadcast %141 : vector<1x128xf32> to vector<8x128xf32>
    %144 = arith.minimumf %142, %143 : vector<8x128xf32>
    %145 = arith.cmpf olt, %117, %135 : vector<8x128xf32>
    %146 = arith.cmpf olt, %126, %144 : vector<8x128xf32>
    %147 = arith.andi %145, %146 : vector<8x128xi1>
    %148 = arith.extui %147 : vector<8x128xi1> to vector<8x128xi32>
    %149 = arith.sitofp %148 : vector<8x128xi32> to vector<8x128xf32>
    %150 = arith.subf %135, %117 : vector<8x128xf32>
    %151 = arith.subf %144, %126 : vector<8x128xf32>
    %152 = arith.mulf %150, %151 : vector<8x128xf32>
    %153 = arith.mulf %152, %149 : vector<8x128xf32>
    %154 = arith.mulf %38, %39 : vector<8x1xf32>
    %155 = arith.mulf %107, %108 : vector<1x128xf32>
    %156 = vector.broadcast %154 : vector<8x1xf32> to vector<8x128xf32>
    %157 = vector.broadcast %155 : vector<1x128xf32> to vector<8x128xf32>
    %158 = arith.addf %156, %157 : vector<8x128xf32>
    %159 = arith.subf %158, %153 : vector<8x128xf32>
    %cst_42 = arith.constant 9.99999971E-10 : f32
    %160 = vector.broadcast %cst_42 : f32 to vector<8x128xf32>
    %161 = arith.addf %159, %160 : vector<8x128xf32>
    %162 = tpu.reciprocal %161 {approx = true} : vector<8x128xf32> -> vector<8x128xf32>
    %163 = arith.mulf %161, %162 : vector<8x128xf32>
    %cst_43 = arith.constant 2.000000e+00 : f32
    %164 = vector.broadcast %cst_43 : f32 to vector<8x128xf32>
    %165 = arith.subf %164, %163 : vector<8x128xf32>
    %166 = arith.mulf %162, %165 : vector<8x128xf32>
    %167 = arith.mulf %153, %166 : vector<8x128xf32>
    %c0_44 = arith.constant 0 : index
    %c0_45 = arith.constant 0 : index
    %c0_46 = arith.constant 0 : index
    %168 = vector.load %arg12[%c0_44, %c0_45, %c0_46] : memref<1x8x128xf32, #tpu.memory_space<vmem>>, vector<1x8x128xf32>
    %169 = vector.shape_cast %168 : vector<1x8x128xf32> to vector<8x128xf32>
    %170 = vector.shape_cast %167 : vector<8x128xf32> to vector<1x8x128xf32>
    tpu.vector_store %arg12[%c0_44, %c0_45, %c0_46], %170 {strides = array<i32>} : memref<1x8x128xf32, #tpu.memory_space<vmem>>, vector<1x8x128xf32>,
    %cst_47 = arith.constant 9.99999993E-9 : f32
    %171 = vector.broadcast %cst_47 : f32 to vector<8x128xf32>
    %172 = arith.addf %167, %171 : vector<8x128xf32>
    %173 = math.log %172 : vector<8x128xf32>
    %cst_48 = arith.constant 0.000000e+00 : f32
    %174 = vector.broadcast %cst_48 : f32 to vector<8x128xf32>
    %175 = arith.subf %174, %173 : vector<8x128xf32>
    %176 = arith.negf %11 : vector<3x128xf32>
    %177 = math.exp %176 : vector<3x128xf32>
    %cst_49 = arith.constant 1.000000e+00 : f32
    %178 = vector.broadcast %cst_49 : f32 to vector<3x128xf32>
    %179 = arith.addf %178, %177 : vector<3x128xf32>
    %180 = arith.divf %178, %179 : vector<3x128xf32>
    %181 = arith.negf %13 : vector<1x128xf32>
    %182 = math.exp %181 : vector<1x128xf32>
    %cst_50 = arith.constant 1.000000e+00 : f32
    %183 = vector.broadcast %cst_50 : f32 to vector<1x128xf32>
    %184 = arith.addf %183, %182 : vector<1x128xf32>
    %185 = arith.divf %183, %184 : vector<1x128xf32>
    %186 = vector.broadcast %185 : vector<1x128xf32> to vector<3x128xf32>
    %187 = arith.mulf %180, %186 : vector<3x128xf32>
    %188 = math.sqrt %187 : vector<3x128xf32>
    %189 = math.log %188 : vector<3x128xf32>
    %cst_51 = arith.constant -1.000000e+02 : f32
    %190 = vector.broadcast %cst_51 : f32 to vector<3x128xf32>
    %191 = arith.maximumf %189, %190 : vector<3x128xf32>
    %cst_52 = arith.constant 1.000000e+00 : f32
    %192 = vector.broadcast %cst_52 : f32 to vector<3x128xf32>
    %193 = arith.subf %192, %188 : vector<3x128xf32>
    %194 = math.log %193 : vector<3x128xf32>
    %cst_53 = arith.constant -1.000000e+02 : f32
    %195 = vector.broadcast %cst_53 : f32 to vector<3x128xf32>
    %196 = arith.maximumf %194, %195 : vector<3x128xf32>
    %197 = arith.subf %191, %196 : vector<3x128xf32>
    %cst_54 = arith.constant dense<0.000000e+00> : vector<128xf32>
    %198 = vector.multi_reduction <add>, %196, %cst_54 [0] : vector<3x128xf32> to vector<128xf32>
    %199 = vector.shape_cast %198 : vector<128xf32> to vector<1x128xf32>
    %c0_55 = arith.constant 0 : index
    %c0_56 = arith.constant 0 : index
    %c0_57 = arith.constant 0 : index
    %200 = vector.load %arg3[%c0_55, %c0_56, %c0_57] : memref<1x8x3xf32, #tpu.memory_space<vmem>>, vector<1x8x3xf32>
    %201 = vector.shape_cast %200 : vector<1x8x3xf32> to vector<8x3xf32>
    %cst_58 = arith.constant dense<0.000000e+00> : vector<8x128xf32>
    %202 = tpu.matmul %201, %197, %cst_58 {dimension_numbers = #tpu.dot_dimension_numbers<[1], [0], [0], [1], [0, 0, 1, 1], [], []>} : vector<8x3xf32>, vector<3x128xf32>, vector<8x128xf32> -> vector<8x128xf32>
    %203 = vector.broadcast %199 : vector<1x128xf32> to vector<8x128xf32>
    %204 = arith.addf %202, %203 : vector<8x128xf32>
    %cst_59 = arith.constant 0.000000e+00 : f32
    %205 = vector.broadcast %cst_59 : f32 to vector<8x128xf32>
    %206 = arith.subf %205, %204 : vector<8x128xf32>
    %cst_60 = arith.constant 1.000000e+00 : f32
    %207 = vector.broadcast %cst_60 : f32 to vector<8x128xf32>
    %208 = arith.mulf %207, %206 : vector<8x128xf32>
    %cst_61 = arith.constant 3.000000e+00 : f32
    %209 = vector.broadcast %cst_61 : f32 to vector<8x128xf32>
    %210 = arith.mulf %209, %175 : vector<8x128xf32>
    %211 = arith.addf %208, %210 : vector<8x128xf32>
    %cst_62 = arith.constant 1.000000e+00 : f32
    %212 = vector.broadcast %cst_62 : f32 to vector<8x128xf32>
    %213 = arith.subf %212, %96 : vector<8x128xf32>
    %cst_63 = arith.constant 1.000000e+05 : f32
    %214 = vector.broadcast %cst_63 : f32 to vector<8x128xf32>
    %215 = arith.mulf %214, %213 : vector<8x128xf32>
    %216 = arith.addf %211, %215 : vector<8x128xf32>
    %c0_64 = arith.constant 0 : index
    %c0_65 = arith.constant 0 : index
    %c0_66 = arith.constant 0 : index
    %217 = vector.load %arg13[%c0_64, %c0_65, %c0_66] : memref<1x8x128xf32, #tpu.memory_space<vmem>>, vector<1x8x128xf32>
    %218 = vector.shape_cast %217 : vector<1x8x128xf32> to vector<8x128xf32>
    %219 = vector.shape_cast %216 : vector<8x128xf32> to vector<1x8x128xf32>
    tpu.vector_store %arg13[%c0_64, %c0_65, %c0_66], %219 {strides = array<i32>} : memref<1x8x128xf32, #tpu.memory_space<vmem>>, vector<1x8x128xf32>,
    return
  }
  func.func @transform_0(%arg0: i32, %arg1: i32) -> (i32, i32, i32) {
    %c0_i32 = arith.constant 0 : i32
    %c0_i32_0 = arith.constant 0 : i32
    %c0_i32_1 = arith.constant 0 : i32
    return %arg0, %c0_i32, %c0_i32_0 : i32, i32, i32
  }
  func.func @transform_1(%arg0: i32, %arg1: i32) -> (i32, i32, i32) {
    %c0_i32 = arith.constant 0 : i32
    %c0_i32_0 = arith.constant 0 : i32
    %c0_i32_1 = arith.constant 0 : i32
    return %arg0, %c0_i32, %c0_i32_0 : i32, i32, i32
  }
  func.func @transform_2(%arg0: i32, %arg1: i32) -> (i32, i32, i32) {
    %c0_i32 = arith.constant 0 : i32
    %c0_i32_0 = arith.constant 0 : i32
    %c0_i32_1 = arith.constant 0 : i32
    return %arg0, %c0_i32, %c0_i32_0 : i32, i32, i32
  }
  func.func @transform_3(%arg0: i32, %arg1: i32) -> (i32, i32) {
    %c0_i32 = arith.constant 0 : i32
    %c0_i32_0 = arith.constant 0 : i32
    return %c0_i32, %arg1 : i32, i32
  }
  func.func @transform_4(%arg0: i32, %arg1: i32) -> (i32, i32) {
    %c0_i32 = arith.constant 0 : i32
    %c0_i32_0 = arith.constant 0 : i32
    return %c0_i32, %arg1 : i32, i32
  }
  func.func @transform_5(%arg0: i32, %arg1: i32) -> (i32, i32, i32) {
    %c0_i32 = arith.constant 0 : i32
    %c0_i32_0 = arith.constant 0 : i32
    return %arg0, %c0_i32, %arg1 : i32, i32, i32
  }
  func.func @transform_6(%arg0: i32, %arg1: i32) -> (i32, i32, i32) {
    %c0_i32 = arith.constant 0 : i32
    %c0_i32_0 = arith.constant 0 : i32
    return %arg0, %c0_i32, %arg1 : i32, i32, i32
  }
  func.func @transform_7(%arg0: i32, %arg1: i32) -> (i32, i32, i32) {
    %c0_i32 = arith.constant 0 : i32
    %c0_i32_0 = arith.constant 0 : i32
    return %arg0, %c0_i32, %arg1 : i32, i32, i32
  }
  func.func @transform_8(%arg0: i32, %arg1: i32) -> (i32, i32, i32) {
    %c0_i32 = arith.constant 0 : i32
    %c0_i32_0 = arith.constant 0 : i32
    return %arg0, %c0_i32, %arg1 : i32, i32, i32
  }
  func.func @transform_9(%arg0: i32, %arg1: i32) -> (i32, i32, i32) {
    %c0_i32 = arith.constant 0 : i32
    %c0_i32_0 = arith.constant 0 : i32
    return %arg0, %c0_i32, %arg1 : i32, i32, i32
  }
  func.func @transform_10(%arg0: i32, %arg1: i32) -> (i32, i32, i32) {
    %c0_i32 = arith.constant 0 : i32
    %c0_i32_0 = arith.constant 0 : i32
    return %arg0, %c0_i32, %arg1 : i32, i32, i32
  }
  func.func @transform_11(%arg0: i32, %arg1: i32) -> (i32, i32, i32) {
    %c0_i32 = arith.constant 0 : i32
    %c0_i32_0 = arith.constant 0 : i32
    return %arg0, %c0_i32, %arg1 : i32, i32, i32
  }
}

</mosaic_0001>

<llo_original>
// kernel: tpu_custom_call.1
$region0: #{tpu_custom_call.1}
  #allocation0 [shape = 'u32[]', space=smem, size = 0x4, offset = 0x4, fixed_abs, tag = 'smem constant byte address 0x4 - core index']
  #allocation1 [shape = 'u32[144,128]{1,0:T(1,128)}', space=vmem, size = 0x12000, scoped, tag = 'internal scratch']
  %s0 = inlined_call_operand.vmem [shape: f32[2,8,4], index: 0, kind: input, shape index: {}]
  %s1 = inlined_call_operand.vmem [shape: f32[2,8,3], index: 1, kind: input, shape index: {}]
  %s2 = inlined_call_operand.vmem [shape: f32[2,8,1], index: 2, kind: input, shape index: {}]
  %s3 = inlined_call_operand.vmem [shape: f32[2,128], index: 3, kind: input, shape index: {}]
  %s4 = inlined_call_operand.vmem [shape: f32[1,128], index: 4, kind: input, shape index: {}]
  %s5 = inlined_call_operand.vmem [shape: f32[2,4,128], index: 5, kind: input, shape index: {}]
  %s6 = inlined_call_operand.vmem [shape: f32[2,3,128], index: 6, kind: input, shape index: {}]
  %s7 = inlined_call_operand.vmem [shape: f32[2,1,128], index: 7, kind: input, shape index: {}]
  %s8 = inlined_call_operand.hbm [shape: f32[2,4,128], index: 8, kind: output, shape index: {0}]
  %s9 = inlined_call_operand.hbm [shape: f32[2,1,128], index: 9, kind: output, shape index: {1}]
  %s10 = inlined_call_operand.hbm [shape: f32[2,8,128], index: 10, kind: output, shape index: {2}]
  %s11 = inlined_call_operand.hbm [shape: f32[2,8,128], index: 11, kind: output, shape index: {3}]
  %12 = xla_tuple %s8, %s9, %s10, %s11
  %s13 = sld [smem:[#allocation0]]
  $region89: #{tpu_custom_call.1} parent=0
    _
  %s15 = ssub.s32 1, %s13
  %s16 = scalar_select 0, %s15, %s13
  $region1: #{tpu_custom_call.1} parent=0
    #allocation2 [shape = 'u8[4096]{0}', space=vmem, size = 0x1000, scoped, tag = 'output window, operand 0']
    #allocation3 [shape = 's32[2]{0}', space=sflag, size = 0x8, scoped, tag = 'scoped memory for tpu_custom_call.1']
    #allocation4 [shape = 'u8[1024]{0}', space=vmem, size = 0x400, scoped, tag = 'output window, operand 1']
    #allocation5 [shape = 's32[2]{0}', space=sflag, size = 0x8, scoped, tag = 'scoped memory for tpu_custom_call.1']
    #allocation6 [shape = 'u8[8192]{0}', space=vmem, size = 0x2000, scoped, tag = 'output window, operand 2']
    #allocation7 [shape = 'u8[8192]{0}', space=vmem, size = 0x2000, scoped, tag = 'output window, operand 3']
    #allocation8 [shape = 's32[2]{0}', space=sflag, size = 0x8, scoped, tag = 'scoped memory for tpu_custom_call.1']
    %17 = vsyncpa [#allocation3], 0
    %s18 = scalar_lea.sflag [#allocation3], 1
    %19 = vsyncpa %s18, 0
    %20 = vsyncpa [#allocation5], 0
    %s21 = scalar_lea.sflag [#allocation5], 1
    %22 = vsyncpa %s21, 0
    %23 = vsyncpa [#allocation8], 0
    %s24 = scalar_lea.sflag [#allocation8], 1
    %25 = vsyncpa %s24, 0
    loop: start=0, step=1, limit=4
    $region2: #{tpu_custom_call.1} parent=1 // loop_pre_header
      _
    $region3: #{tpu_custom_call.1} parent=1 // loop_header
      %s27 = sphi 0, %s31
      %p28 = scmp.ge.s32.totalorder %s27, 4
      %s34 = sphi 0, %s46
      %s35 = sphi 0, %s42
      %s36 = sphi 0, %s34
      %s37 = sphi 0, %s35
      %s38 = sphi 0, %s36
      %s39 = sphi 0, %s37
      %s49 = sphi 0, %s51
      %s52 = sphi 0, %s49
      %s53 = sphi 0, %s52
      %s69 = sphi 0, %s53
      %s75 = sphi 0, %s77
      %s78 = sphi 0, %s75
      %s79 = sphi 0, %s78
      %s95 = sphi 0, %s79
      %s101 = sphi 0, %s103
      %s104 = sphi 0, %s101
      %s105 = sphi 0, %s104
      %s121 = sphi 0, %s105
      %s127 = sphi 0, %s129
      %s130 = sphi 0, %s127
      %s131 = sphi 0, %s130
      %s147 = sphi 0, %s131
      %s153 = sphi 0, %s155
      %s156 = sphi 0, %s153
      %s157 = sphi 0, %s156
      %s173 = sphi 0, %s157
      %s181 = sphi 0, %s183
      %s184 = sphi 0, %s181
      %s185 = sphi 0, %s184
      %s201 = sphi 0, %s185
      %s209 = sphi 0, %s211
      %s212 = sphi 0, %s209
      %s213 = sphi 0, %s212
      %s229 = sphi 0, %s213
      %s237 = sphi 0, %s239
      %s240 = sphi 0, %s237
      %s241 = sphi 0, %s240
      %s257 = sphi 0, %s241
      %s265 = sphi 0, %s267
      %s268 = sphi 0, %s265
      %s269 = sphi 0, %s268
      %s285 = sphi 0, %s269
      %s293 = sphi 0, %s295
      %s296 = sphi 0, %s293
      %s297 = sphi 0, %s296
      %s313 = sphi 0, %s297
      %s321 = sphi 0, %s323
      %s324 = sphi 0, %s321
      %s325 = sphi 0, %s324
      %s341 = sphi 0, %s325
      %s349 = sphi 0, %s351
      %s352 = sphi 0, %s349
      %s353 = sphi 0, %s352
      %s369 = sphi 0, %s353
    $region4: #{tpu_custom_call.1} parent=1 // loop_header_branch
      %30 = sbr.rel (%p28) target = $region8
    $region5: #{tpu_custom_call.1} parent=1 // loop_body
      %s32 = ssub.s32 %s27, 1
      %s33 = ssub.s32 %s27, 2
      %s40 = sadd.s32 1, %s35
      %p41 = scmp.ge.s32.totalorder %s40, 1
      %s42 = scalar_select %p41, 0, %s40
      %s43 = sadd.s32 1, %s34
      %s44 = scalar_select %p41, %s43, %s34
      %p45 = scmp.ge.s32.totalorder %s44, 2
      %s46 = scalar_select %p45, 0, %s44
      %s47 = ssub.s32 %s34, %s46
      %p48 = scmp.eq.s32.totalorder %s47, 0
      %s50 = sadd.s32 %s49, 1
      %s51 = scalar_select %p48, %s49, %s50
      %p54 = pneg %p48
      %p55 = scmp.eq.s32.totalorder %s27, 1
      %p56 = por %p54, %p55
      %p57 = scmp.ne.s32.totalorder %s49, %s52
      %p58 = scmp.eq.s32.totalorder %s27, 0
      %p59 = por %p57, %p58
      %p60 = scmp.ne.s32.totalorder %s49, %s52
      %p61 = scmp.eq.s32.totalorder %s32, 1
      %p62 = por %p60, %p61
      %p63 = scmp.ne.s32.totalorder %s52, %s53
      %p64 = scmp.eq.s32.totalorder %s32, 0
      %p65 = por %p63, %p64
      %p66 = scmp.ne.s32.totalorder %s52, %s53
      %p67 = scmp.eq.s32.totalorder %s33, 1
      %p68 = por %p66, %p67
      %p70 = scmp.ne.s32.totalorder %s53, %s69
      %p71 = scmp.eq.s32.totalorder %s33, 0
      %p72 = por %p70, %p71
      %s73 = ssub.s32 %s34, %s46
      %p74 = scmp.eq.s32.totalorder %s73, 0
      %s76 = sadd.s32 %s75, 1
      %s77 = scalar_select %p74, %s75, %s76
      %p80 = pneg %p74
      %p81 = scmp.eq.s32.totalorder %s27, 1
      %p82 = por %p80, %p81
      %p83 = scmp.ne.s32.totalorder %s75, %s78
      %p84 = scmp.eq.s32.totalorder %s27, 0
      %p85 = por %p83, %p84
      %p86 = scmp.ne.s32.totalorder %s75, %s78
      %p87 = scmp.eq.s32.totalorder %s32, 1
      %p88 = por %p86, %p87
      %p89 = scmp.ne.s32.totalorder %s78, %s79
      %p90 = scmp.eq.s32.totalorder %s32, 0
      %p91 = por %p89, %p90
      %p92 = scmp.ne.s32.totalorder %s78, %s79
      %p93 = scmp.eq.s32.totalorder %s33, 1
      %p94 = por %p92, %p93
      %p96 = scmp.ne.s32.totalorder %s79, %s95
      %p97 = scmp.eq.s32.totalorder %s33, 0
      %p98 = por %p96, %p97
      %s99 = ssub.s32 %s34, %s46
      %p100 = scmp.eq.s32.totalorder %s99, 0
      %s102 = sadd.s32 %s101, 1
      %s103 = scalar_select %p100, %s101, %s102
      %p106 = pneg %p100
      %p107 = scmp.eq.s32.totalorder %s27, 1
      %p108 = por %p106, %p107
      %p109 = scmp.ne.s32.totalorder %s101, %s104
      %p110 = scmp.eq.s32.totalorder %s27, 0
      %p111 = por %p109, %p110
      %p112 = scmp.ne.s32.totalorder %s101, %s104
      %p113 = scmp.eq.s32.totalorder %s32, 1
      %p114 = por %p112, %p113
      %p115 = scmp.ne.s32.totalorder %s104, %s105
      %p116 = scmp.eq.s32.totalorder %s32, 0
      %p117 = por %p115, %p116
      %p118 = scmp.ne.s32.totalorder %s104, %s105
      %p119 = scmp.eq.s32.totalorder %s33, 1
      %p120 = por %p118, %p119
      %p122 = scmp.ne.s32.totalorder %s105, %s121
      %p123 = scmp.eq.s32.totalorder %s33, 0
      %p124 = por %p122, %p123
      %s125 = ssub.s32 %s35, %s42
      %p126 = scmp.eq.s32.totalorder %s125, 0
      %s128 = sadd.s32 %s127, 1
      %s129 = scalar_select %p126, %s127, %s128
      %p132 = pneg %p126
      %p133 = scmp.eq.s32.totalorder %s27, 1
      %p134 = por %p132, %p133
      %p135 = scmp.ne.s32.totalorder %s127, %s130
      %p136 = scmp.eq.s32.totalorder %s27, 0
      %p137 = por %p135, %p136
      %p138 = scmp.ne.s32.totalorder %s127, %s130
      %p139 = scmp.eq.s32.totalorder %s32, 1
      %p140 = por %p138, %p139
      %p141 = scmp.ne.s32.totalorder %s130, %s131
      %p142 = scmp.eq.s32.totalorder %s32, 0
      %p143 = por %p141, %p142
      %p144 = scmp.ne.s32.totalorder %s130, %s131
      %p145 = scmp.eq.s32.totalorder %s33, 1
      %p146 = por %p144, %p145
      %p148 = scmp.ne.s32.totalorder %s131, %s147
      %p149 = scmp.eq.s32.totalorder %s33, 0
      %p150 = por %p148, %p149
      %s151 = ssub.s32 %s35, %s42
      %p152 = scmp.eq.s32.totalorder %s151, 0
      %s154 = sadd.s32 %s153, 1
      %s155 = scalar_select %p152, %s153, %s154
      %p158 = pneg %p152
      %p159 = scmp.eq.s32.totalorder %s27, 1
      %p160 = por %p158, %p159
      %p161 = scmp.ne.s32.totalorder %s153, %s156
      %p162 = scmp.eq.s32.totalorder %s27, 0
      %p163 = por %p161, %p162
      %p164 = scmp.ne.s32.totalorder %s153, %s156
      %p165 = scmp.eq.s32.totalorder %s32, 1
      %p166 = por %p164, %p165
      %p167 = scmp.ne.s32.totalorder %s156, %s157
      %p168 = scmp.eq.s32.totalorder %s32, 0
      %p169 = por %p167, %p168
      %p170 = scmp.ne.s32.totalorder %s156, %s157
      %p171 = scmp.eq.s32.totalorder %s33, 1
      %p172 = por %p170, %p171
      %p174 = scmp.ne.s32.totalorder %s157, %s173
      %p175 = scmp.eq.s32.totalorder %s33, 0
      %p176 = por %p174, %p175
      %s177 = ssub.s32 %s34, %s46
      %s178 = ssub.s32 %s35, %s42
      %s179 = sor.u32 %s177, %s178
      %p180 = scmp.eq.s32.totalorder %s179, 0
      %s182 = sadd.s32 %s181, 1
      %s183 = scalar_select %p180, %s181, %s182
      %p186 = pneg %p180
      %p187 = scmp.eq.s32.totalorder %s27, 1
      %p188 = por %p186, %p187
      %p189 = scmp.ne.s32.totalorder %s181, %s184
      %p190 = scmp.eq.s32.totalorder %s27, 0
      %p191 = por %p189, %p190
      %p192 = scmp.ne.s32.totalorder %s181, %s184
      %p193 = scmp.eq.s32.totalorder %s32, 1
      %p194 = por %p192, %p193
      %p195 = scmp.ne.s32.totalorder %s184, %s185
      %p196 = scmp.eq.s32.totalorder %s32, 0
      %p197 = por %p195, %p196
      %p198 = scmp.ne.s32.totalorder %s184, %s185
      %p199 = scmp.eq.s32.totalorder %s33, 1
      %p200 = por %p198, %p199
      %p202 = scmp.ne.s32.totalorder %s185, %s201
      %p203 = scmp.eq.s32.totalorder %s33, 0
      %p204 = por %p202, %p203
      %s205 = ssub.s32 %s34, %s46
      %s206 = ssub.s32 %s35, %s42
      %s207 = sor.u32 %s205, %s206
      %p208 = scmp.eq.s32.totalorder %s207, 0
      %s210 = sadd.s32 %s209, 1
      %s211 = scalar_select %p208, %s209, %s210
      %p214 = pneg %p208
      %p215 = scmp.eq.s32.totalorder %s27, 1
      %p216 = por %p214, %p215
      %p217 = scmp.ne.s32.totalorder %s209, %s212
      %p218 = scmp.eq.s32.totalorder %s27, 0
      %p219 = por %p217, %p218
      %p220 = scmp.ne.s32.totalorder %s209, %s212
      %p221 = scmp.eq.s32.totalorder %s32, 1
      %p222 = por %p220, %p221
      %p223 = scmp.ne.s32.totalorder %s212, %s213
      %p224 = scmp.eq.s32.totalorder %s32, 0
      %p225 = por %p223, %p224
      %p226 = scmp.ne.s32.totalorder %s212, %s213
      %p227 = scmp.eq.s32.totalorder %s33, 1
      %p228 = por %p226, %p227
      %p230 = scmp.ne.s32.totalorder %s213, %s229
      %p231 = scmp.eq.s32.totalorder %s33, 0
      %p232 = por %p230, %p231
      %s233 = ssub.s32 %s34, %s46
      %s234 = ssub.s32 %s35, %s42
      %s235 = sor.u32 %s233, %s234
      %p236 = scmp.eq.s32.totalorder %s235, 0
      %s238 = sadd.s32 %s237, 1
      %s239 = scalar_select %p236, %s237, %s238
      %p242 = pneg %p236
      %p243 = scmp.eq.s32.totalorder %s27, 1
      %p244 = por %p242, %p243
      %p245 = scmp.ne.s32.totalorder %s237, %s240
      %p246 = scmp.eq.s32.totalorder %s27, 0
      %p247 = por %p245, %p246
      %p248 = scmp.ne.s32.totalorder %s237, %s240
      %p249 = scmp.eq.s32.totalorder %s32, 1
      %p250 = por %p248, %p249
      %p251 = scmp.ne.s32.totalorder %s240, %s241
      %p252 = scmp.eq.s32.totalorder %s32, 0
      %p253 = por %p251, %p252
      %p254 = scmp.ne.s32.totalorder %s240, %s241
      %p255 = scmp.eq.s32.totalorder %s33, 1
      %p256 = por %p254, %p255
      %p258 = scmp.ne.s32.totalorder %s241, %s257
      %p259 = scmp.eq.s32.totalorder %s33, 0
      %p260 = por %p258, %p259
      %s261 = ssub.s32 %s34, %s46
      %s262 = ssub.s32 %s35, %s42
      %s263 = sor.u32 %s261, %s262
      %p264 = scmp.eq.s32.totalorder %s263, 0
      %s266 = sadd.s32 %s265, 1
      %s267 = scalar_select %p264, %s265, %s266
      %p270 = pneg %p264
      %p271 = scmp.eq.s32.totalorder %s27, 1
      %p272 = por %p270, %p271
      %p273 = scmp.ne.s32.totalorder %s265, %s268
      %p274 = scmp.eq.s32.totalorder %s27, 0
      %p275 = por %p273, %p274
      %p276 = scmp.ne.s32.totalorder %s265, %s268
      %p277 = scmp.eq.s32.totalorder %s32, 1
      %p278 = por %p276, %p277
      %p279 = scmp.ne.s32.totalorder %s268, %s269
      %p280 = scmp.eq.s32.totalorder %s32, 0
      %p281 = por %p279, %p280
      %p282 = scmp.ne.s32.totalorder %s268, %s269
      %p283 = scmp.eq.s32.totalorder %s33, 1
      %p284 = por %p282, %p283
      %p286 = scmp.ne.s32.totalorder %s269, %s285
      %p287 = scmp.eq.s32.totalorder %s33, 0
      %p288 = por %p286, %p287
      %s289 = ssub.s32 %s34, %s46
      %s290 = ssub.s32 %s35, %s42
      %s291 = sor.u32 %s289, %s290
      %p292 = scmp.eq.s32.totalorder %s291, 0
      %s294 = sadd.s32 %s293, 1
      %s295 = scalar_select %p292, %s293, %s294
      %p298 = pneg %p292
      %p299 = scmp.eq.s32.totalorder %s27, 1
      %p300 = por %p298, %p299
      %p301 = scmp.ne.s32.totalorder %s293, %s296
      %p302 = scmp.eq.s32.totalorder %s27, 0
      %p303 = por %p301, %p302
      %p304 = scmp.ne.s32.totalorder %s293, %s296
      %p305 = scmp.eq.s32.totalorder %s32, 1
      %p306 = por %p304, %p305
      %p307 = scmp.ne.s32.totalorder %s296, %s297
      %p308 = scmp.eq.s32.totalorder %s32, 0
      %p309 = por %p307, %p308
      %p310 = scmp.ne.s32.totalorder %s296, %s297
      %p311 = scmp.eq.s32.totalorder %s33, 1
      %p312 = por %p310, %p311
      %p314 = scmp.ne.s32.totalorder %s297, %s313
      %p315 = scmp.eq.s32.totalorder %s33, 0
      %p316 = por %p314, %p315
      %s317 = ssub.s32 %s34, %s46
      %s318 = ssub.s32 %s35, %s42
      %s319 = sor.u32 %s317, %s318
      %p320 = scmp.eq.s32.totalorder %s319, 0
      %s322 = sadd.s32 %s321, 1
      %s323 = scalar_select %p320, %s321, %s322
      %p326 = pneg %p320
      %p327 = scmp.eq.s32.totalorder %s27, 1
      %p328 = por %p326, %p327
      %p329 = scmp.ne.s32.totalorder %s321, %s324
      %p330 = scmp.eq.s32.totalorder %s27, 0
      %p331 = por %p329, %p330
      %p332 = scmp.ne.s32.totalorder %s321, %s324
      %p333 = scmp.eq.s32.totalorder %s32, 1
      %p334 = por %p332, %p333
      %p335 = scmp.ne.s32.totalorder %s324, %s325
      %p336 = scmp.eq.s32.totalorder %s32, 0
      %p337 = por %p335, %p336
      %p338 = scmp.ne.s32.totalorder %s324, %s325
      %p339 = scmp.eq.s32.totalorder %s33, 1
      %p340 = por %p338, %p339
      %p342 = scmp.ne.s32.totalorder %s325, %s341
      %p343 = scmp.eq.s32.totalorder %s33, 0
      %p344 = por %p342, %p343
      %s345 = ssub.s32 %s34, %s46
      %s346 = ssub.s32 %s35, %s42
      %s347 = sor.u32 %s345, %s346
      %p348 = scmp.eq.s32.totalorder %s347, 0
      %s350 = sadd.s32 %s349, 1
      %s351 = scalar_select %p348, %s349, %s350
      %p354 = pneg %p348
      %p355 = scmp.eq.s32.totalorder %s27, 1
      %p356 = por %p354, %p355
      %p357 = scmp.ne.s32.totalorder %s349, %s352
      %p358 = scmp.eq.s32.totalorder %s27, 0
      %p359 = por %p357, %p358
      %p360 = scmp.ne.s32.totalorder %s349, %s352
      %p361 = scmp.eq.s32.totalorder %s32, 1
      %p362 = por %p360, %p361
      %p363 = scmp.ne.s32.totalorder %s352, %s353
      %p364 = scmp.eq.s32.totalorder %s32, 0
      %p365 = por %p363, %p364
      %p366 = scmp.ne.s32.totalorder %s352, %s353
      %p367 = scmp.eq.s32.totalorder %s33, 1
      %p368 = por %p366, %p367
      %p370 = scmp.ne.s32.totalorder %s353, %s369
      %p371 = scmp.eq.s32.totalorder %s33, 0
      %p372 = por %p370, %p371
      %p373 = scmp.le.s32.totalorder 1, %s27
      %p374 = scmp.lt.s32.totalorder %s27, 3
      %p375 = pnand %p373, %p374
      %p376 = pneg %p375
      // Predicated region
      $region9: #{tpu_custom_call.1} parent=5 // pred_check
        _
      $region10: #{tpu_custom_call.1} parent=5 // pred_check_branch
        %378 = sbr.rel (%p375) target = $region12
      $region11: #{tpu_custom_call.1} parent=5 // pred_region
        %s379 = ssub.s32 %s27, 1
        // Predicated region
        $region13: #{tpu_custom_call.1} parent=11 // pred_check
          %p380 = pneg %p143
        $region14: #{tpu_custom_call.1} parent=11 // pred_check_branch
          %382 = sbr.rel (%p380) target = $region16
        $region15: #{tpu_custom_call.1} parent=11 // pred_region
          %p383 = scmp.lt.s32.totalorder %s37, 0
          %s384 = scalar_select %p383, %s37, 0
          %s385 = smul.addr %s384, 2
          %s386 = scalar_lea.vmem %s3, %s385
        $region16: #{tpu_custom_call.1} parent=11 // pred_fallthru
          _
        // Predicated region
        $region17: #{tpu_custom_call.1} parent=11 // pred_check
          %p387 = pneg %p169
        $region18: #{tpu_custom_call.1} parent=11 // pred_check_branch
          %389 = sbr.rel (%p387) target = $region20
        $region19: #{tpu_custom_call.1} parent=11 // pred_region
          %p390 = scmp.lt.s32.totalorder %s37, 0
          %s391 = scalar_select %p390, %s37, 0
          %s392 = scalar_lea.vmem %s4, %s391
        $region20: #{tpu_custom_call.1} parent=11 // pred_fallthru
          _
      $region12: #{tpu_custom_call.1} parent=5 // pred_fallthru
        _
      %p393 = scmp.lt.s32.totalorder %s27, 2
      // Predicated region
      $region21: #{tpu_custom_call.1} parent=5 // pred_check
        %p394 = pneg %p393
      $region22: #{tpu_custom_call.1} parent=5 // pred_check_branch
        %396 = sbr.rel (%p394) target = $region24
      $region23: #{tpu_custom_call.1} parent=5 // pred_region
        // Predicated region
        $region25: #{tpu_custom_call.1} parent=23 // pred_check
          %p397 = pneg %p59
        $region26: #{tpu_custom_call.1} parent=23 // pred_check_branch
          %399 = sbr.rel (%p397) target = $region28
        $region27: #{tpu_custom_call.1} parent=23 // pred_region
          %p400 = scmp.lt.s32.totalorder %s34, 1
          %s401 = scalar_select %p400, %s34, 1
          %s402 = smul.addr %s401, 8
          %s403 = scalar_lea.vmem %s0, %s402
        $region28: #{tpu_custom_call.1} parent=23 // pred_fallthru
          _
        // Predicated region
        $region29: #{tpu_custom_call.1} parent=23 // pred_check
          %p404 = pneg %p85
        $region30: #{tpu_custom_call.1} parent=23 // pred_check_branch
          %406 = sbr.rel (%p404) target = $region32
        $region31: #{tpu_custom_call.1} parent=23 // pred_region
          %p407 = scmp.lt.s32.totalorder %s34, 1
          %s408 = scalar_select %p407, %s34, 1
          %s409 = smul.addr %s408, 8
          %s410 = scalar_lea.vmem %s1, %s409
        $region32: #{tpu_custom_call.1} parent=23 // pred_fallthru
          _
        // Predicated region
        $region33: #{tpu_custom_call.1} parent=23 // pred_check
          %p411 = pneg %p111
        $region34: #{tpu_custom_call.1} parent=23 // pred_check_branch
          %413 = sbr.rel (%p411) target = $region36
        $region35: #{tpu_custom_call.1} parent=23 // pred_region
          %p414 = scmp.lt.s32.totalorder %s34, 1
          %s415 = scalar_select %p414, %s34, 1
          %s416 = smul.addr %s415, 8
          %s417 = scalar_lea.vmem %s2, %s416
        $region36: #{tpu_custom_call.1} parent=23 // pred_fallthru
          _
        // Predicated region
        $region37: #{tpu_custom_call.1} parent=23 // pred_check
          %p418 = pneg %p191
        $region38: #{tpu_custom_call.1} parent=23 // pred_check_branch
          %420 = sbr.rel (%p418) target = $region40
        $region39: #{tpu_custom_call.1} parent=23 // pred_region
          %p421 = scmp.lt.s32.totalorder %s34, 1
          %s422 = scalar_select %p421, %s34, 1
          %p423 = scmp.lt.s32.totalorder %s35, 0
          %s424 = scalar_select %p423, %s35, 0
          %s425 = sadd.s32 %s424, %s422
          %s426 = smul.addr %s425, 4
          %s427 = scalar_lea.vmem %s5, %s426
        $region40: #{tpu_custom_call.1} parent=23 // pred_fallthru
          _
        // Predicated region
        $region41: #{tpu_custom_call.1} parent=23 // pred_check
          %p428 = pneg %p219
        $region42: #{tpu_custom_call.1} parent=23 // pred_check_branch
          %430 = sbr.rel (%p428) target = $region44
        $region43: #{tpu_custom_call.1} parent=23 // pred_region
          %p431 = scmp.lt.s32.totalorder %s34, 1
          %s432 = scalar_select %p431, %s34, 1
          %p433 = scmp.lt.s32.totalorder %s35, 0
          %s434 = scalar_select %p433, %s35, 0
          %s435 = sadd.s32 %s434, %s432
          %s436 = smul.addr %s435, 4
          %s437 = scalar_lea.vmem %s6, %s436
        $region44: #{tpu_custom_call.1} parent=23 // pred_fallthru
          _
        // Predicated region
        $region45: #{tpu_custom_call.1} parent=23 // pred_check
          %p438 = pneg %p247
        $region46: #{tpu_custom_call.1} parent=23 // pred_check_branch
          %440 = sbr.rel (%p438) target = $region48
        $region47: #{tpu_custom_call.1} parent=23 // pred_region
          %p441 = scmp.lt.s32.totalorder %s34, 1
          %s442 = scalar_select %p441, %s34, 1
          %p443 = scmp.lt.s32.totalorder %s35, 0
          %s444 = scalar_select %p443, %s35, 0
          %s445 = sadd.s32 %s444, %s442
          %s446 = scalar_lea.vmem %s7, %s445
        $region48: #{tpu_custom_call.1} parent=23 // pred_fallthru
          _
      $region24: #{tpu_custom_call.1} parent=5 // pred_fallthru
        _
      %p447 = scmp.le.s32.totalorder 1, %s27
      %p448 = scmp.lt.s32.totalorder %s27, 3
      %p449 = pnand %p447, %p448
      %p450 = pneg %p449
      // Predicated region
      $region49: #{tpu_custom_call.1} parent=5 // pred_check
        _
      $region50: #{tpu_custom_call.1} parent=5 // pred_check_branch
        %452 = sbr.rel (%p449) target = $region52
      $region51: #{tpu_custom_call.1} parent=5 // pred_region
        %s453 = ssub.s32 %s27, 1
        %p454 = scmp.lt.s32.totalorder %s36, 1
        %s455 = scalar_select %p454, %s36, 1
        %s456 = smul.addr %s455, 8
        %s457 = scalar_lea.vmem %s0, %s456
        %p458 = pneg %p65
        %p459 = pneg %p62
        %p460 = scmp.lt.s32.totalorder %s36, 1
        %s461 = scalar_select %p460, %s36, 1
        %s462 = smul.addr %s461, 8
        %s463 = scalar_lea.vmem %s1, %s462
        %p464 = pneg %p91
        %p465 = pneg %p88
        %p466 = scmp.lt.s32.totalorder %s36, 1
        %s467 = scalar_select %p466, %s36, 1
        %s468 = smul.addr %s467, 8
        %s469 = scalar_lea.vmem %s2, %s468
        %p470 = pneg %p117
        %p471 = pneg %p114
        %p472 = scmp.lt.s32.totalorder %s37, 0
        %s473 = scalar_select %p472, %s37, 0
        %s474 = smul.addr %s473, 2
        %s475 = scalar_lea.vmem %s3, %s474
        %p476 = pneg %p143
        %p477 = pneg %p140
        %p478 = scmp.lt.s32.totalorder %s37, 0
        %s479 = scalar_select %p478, %s37, 0
        %s480 = scalar_lea.vmem %s4, %s479
        %p481 = pneg %p169
        %p482 = pneg %p166
        %p483 = scmp.lt.s32.totalorder %s36, 1
        %s484 = scalar_select %p483, %s36, 1
        %p485 = scmp.lt.s32.totalorder %s37, 0
        %s486 = scalar_select %p485, %s37, 0
        %s487 = sadd.s32 %s486, %s484
        %s488 = smul.addr %s487, 4
        %s489 = scalar_lea.vmem %s5, %s488
        %p490 = pneg %p197
        %p491 = pneg %p194
        %p492 = scmp.lt.s32.totalorder %s36, 1
        %s493 = scalar_select %p492, %s36, 1
        %p494 = scmp.lt.s32.totalorder %s37, 0
        %s495 = scalar_select %p494, %s37, 0
        %s496 = sadd.s32 %s495, %s493
        %s497 = smul.addr %s496, 4
        %s498 = scalar_lea.vmem %s6, %s497
        %p499 = pneg %p225
        %p500 = pneg %p222
        %p501 = scmp.lt.s32.totalorder %s36, 1
        %s502 = scalar_select %p501, %s36, 1
        %p503 = scmp.lt.s32.totalorder %s37, 0
        %s504 = scalar_select %p503, %s37, 0
        %s505 = sadd.s32 %s504, %s502
        %s506 = scalar_lea.vmem %s7, %s505
        %p507 = pneg %p253
        %p508 = pneg %p250
        %p509 = pneg %p281
        %p510 = pneg %p278
        %s511 = sand.u32 %s268, 1
        %s512 = scalar_lea.sflag [#allocation3], %s511
        %s513 = sand.u32 %s268, 1
        %s514 = smul.addr %s513, 4
        %s515 = scalar_lea.vmem [#allocation2], %s514
        %p516 = pneg %p309
        %p517 = pneg %p306
        %s518 = sand.u32 %s32, 1
        %s519 = scalar_lea.sflag [#allocation5], %s518
        %s520 = sand.u32 %s296, 1
        %s521 = scalar_lea.vmem [#allocation4], %s520
        %p522 = pneg %p337
        %p523 = pneg %p334
        %s524 = sand.u32 %s32, 1
        %s525 = scalar_lea.sflag [#allocation5], %s524
        %s526 = sand.u32 %s324, 1
        %s527 = smul.addr %s526, 8
        %s528 = scalar_lea.vmem [#allocation6], %s527
        %p529 = pneg %p365
        %p530 = pneg %p362
        %s531 = sand.u32 %s352, 1
        %s532 = scalar_lea.sflag [#allocation8], %s531
        %s533 = sand.u32 %s352, 1
        %s534 = smul.addr %s533, 8
        %s535 = scalar_lea.vmem [#allocation7], %s534
        %p536 = scmp.lt.s32.totalorder %s36, 1
        %s537 = scalar_select %p536, %s36, 1
        %s538 = smul.addr %s537, 8
        %s539 = scalar_lea.vmem %s0, %s538
        %p540 = scmp.lt.s32.totalorder %s36, 1
        %s541 = scalar_select %p540, %s36, 1
        %s542 = smul.addr %s541, 8
        %s543 = scalar_lea.vmem %s1, %s542
        %p544 = scmp.lt.s32.totalorder %s36, 1
        %s545 = scalar_select %p544, %s36, 1
        %s546 = smul.addr %s545, 8
        %s547 = scalar_lea.vmem %s2, %s546
        %p548 = scmp.lt.s32.totalorder %s37, 0
        %s549 = scalar_select %p548, %s37, 0
        %s550 = smul.addr %s549, 2
        %s551 = scalar_lea.vmem %s3, %s550
        %p552 = scmp.lt.s32.totalorder %s37, 0
        %s553 = scalar_select %p552, %s37, 0
        %s554 = scalar_lea.vmem %s4, %s553
        %p555 = scmp.lt.s32.totalorder %s36, 1
        %s556 = scalar_select %p555, %s36, 1
        %p557 = scmp.lt.s32.totalorder %s37, 0
        %s558 = scalar_select %p557, %s37, 0
        %s559 = sadd.s32 %s558, %s556
        %s560 = smul.addr %s559, 4
        %s561 = scalar_lea.vmem %s5, %s560
        %p562 = scmp.lt.s32.totalorder %s36, 1
        %s563 = scalar_select %p562, %s36, 1
        %p564 = scmp.lt.s32.totalorder %s37, 0
        %s565 = scalar_select %p564, %s37, 0
        %s566 = sadd.s32 %s565, %s563
        %s567 = smul.addr %s566, 4
        %s568 = scalar_lea.vmem %s6, %s567
        %p569 = scmp.lt.s32.totalorder %s36, 1
        %s570 = scalar_select %p569, %s36, 1
        %p571 = scmp.lt.s32.totalorder %s37, 0
        %s572 = scalar_select %p571, %s37, 0
        %s573 = sadd.s32 %s572, %s570
        %s574 = scalar_lea.vmem %s7, %s573
        %v575 = vld [vmem:[%s539] sm:$0xff]
        %v576 = vld [vmem:[%s547] sm:$0xff]
        %vm577 = vcmp.gt.f32.partialorder %v576, 0.5
        %v578 = vld [vmem:[%s551] sm:$0x3]
        %v579 = vld [vmem:[%s554] sm:$0x1]
        %v580 = vld [vmem:[%s561] sm:$0xf]
        %v581 = vld [vmem:[%s568] sm:$0x7]
        %v582 = vld [vmem:[%s574] sm:$0x1]
        %v583 = vadd.f32 %v580, %v578
        %v585 = vlaneseq
        %v586 = vshrl.u32 %v585, 7
        %v587 = vsub.s32 0, %v586
        %v588 = vrot.slane %v579, %v587
        %v590 = vmul.f32 %v583, %v588
        %v591 = vmul.f32 %v580, 1.442695
        %v592 = vpow.pop %v591
        %v593 = vmul.f32 %v592, %v588
        %594 = vst [vmem:[%s515] sm:$0x3] %v590
        %595 = vst [vmem:[%s515] sm:$0xc] %v593
        %v596 = vmul.f32 %v578, %v588
        %v597 = vmul.f32 %v579, 0.5
        %v599 = vlaneseq
        %v600 = vshrl.u32 %v599, 7
        %v601 = vsub.s32 0, %v600
        %v602 = vrot.slane %v597, %v601
        %v604 = vadd.f32 %v596, %v602
        %v605 = vmul.f32 %v575, 0.5
        %607 = vrot.lane.b32.xlu0 %v605, 126
        %v608 = vpop.permute.xlu0 %607
        %v610 = vsub.f32 %v575, %v608
        %v611 = vlaneseq
        %v612 = vshrl.u32 %v611, 7
        %v613 = vsub.s32 0, %v612
        %v614 = vrot.slane %v604, %v613
        %616 = vset.pattern.permute.xlu0 0
        %617 = vperm.xlu0 %616, %v610
        %v618 = vpop.permute.xlu0 %617
        %vm620 = vcmp.gt.f32.partialorder %v614, %v618
        %v621 = vlaneseq
        %v622 = vshrl.u32 %v621, 7
        %v623 = vsub.s32 1, %v622
        %v624 = vrot.slane %v604, %v623
        %625 = vset.pattern.permute.xlu0 1
        %626 = vperm.xlu0 %625, %v610
        %v627 = vpop.permute.xlu0 %626
        %vm629 = vcmp.gt.f32.partialorder %v624, %v627
        %vm630 = vmand %vm620, %vm629
        %v631 = vadd.f32 %v575, %v608
        %633 = vset.pattern.permute.xlu0 0
        %634 = vperm.xlu0 %633, %v631
        %v635 = vpop.permute.xlu0 %634
        %vm637 = vcmp.gt.f32.partialorder %v635, %v614
        %vm638 = vmand %vm630, %vm637
        %639 = vset.pattern.permute.xlu0 1
        %640 = vperm.xlu0 %639, %v631
        %v641 = vpop.permute.xlu0 %640
        %vm643 = vcmp.gt.f32.partialorder %v641, %v624
        %vm644 = vmand %vm638, %vm643
        %v645 = vsel %vm577, 1, 0
        %646 = vset.pattern.permute.xlu0 0
        %647 = vperm.xlu0 %646, %v645
        %v648 = vpop.permute.xlu0 %647
        %vm649 = vcmp.eq.s32.totalorder %v648, 1
        %vm650 = vmand %vm644, %vm649
        %v651 = vmul.f32 %v579, 2.5
        %653 = vset.pattern.permute.xlu0 0
        %654 = vperm.xlu0 %653, %v575
        %v655 = vpop.permute.xlu0 %654
        %v658 = vlaneseq
        %v659 = vshrl.u32 %v658, 7
        %v660 = vsub.s32 0, %v659
        %v661 = vrot.slane %v651, %v660
        %v663 = vsub.f32 %v655, %v661
        %vm664 = vcmp.gt.f32.partialorder %v614, %v663
        %665 = vset.pattern.permute.xlu0 1
        %666 = vperm.xlu0 %665, %v575
        %v667 = vpop.permute.xlu0 %666
        %v669 = vsub.f32 %v667, %v661
        %vm670 = vcmp.gt.f32.partialorder %v624, %v669
        %vm671 = vmand %vm664, %vm670
        %vm672 = vcmp.gt.f32.partialorder %v655, %v614
        %vm673 = vmand %vm671, %vm672
        %vm674 = vcmp.gt.f32.partialorder %v667, %v624
        %vm675 = vmand %vm673, %vm674
        %vm676 = vmand %vm675, %vm649
        %vm677 = vmand %vm650, %vm676
        %v678 = vsel %vm677, 1, 0
        %v679 = vcvt.s32.f32 %v678
        %vm680 = vmor %vm650, %vm676
        %v681 = vsel %vm680, 1, 0
        %v682 = vcvt.s32.f32 %v681
        %v683 = vrot.slane %v682, 4
        %v684 = vmax.f32 %v682, %v683
        %v685 = vrot.slane %v684, 2
        %v686 = vmax.f32 %v684, %v685
        %v687 = vrot.slane %v686, 1
        %v688 = vmax.f32 %v686, %v687
        %689 = vst [vmem:[%s521] sm:$0x1] %v688
        %v690 = vmul.f32 %v593, 0.5
        %v692 = vrot.slane %v690, 2
        %v694 = vsub.f32 %v590, %v692
        %v695 = vlaneseq
        %v696 = vshrl.u32 %v695, 7
        %v697 = vsub.s32 0, %v696
        %v698 = vrot.slane %v694, %v697
        %v699 = vmax.f32 %v618, %v698
        %v700 = vlaneseq
        %v701 = vshrl.u32 %v700, 7
        %v702 = vsub.s32 1, %v701
        %v703 = vrot.slane %v694, %v702
        %v704 = vmax.f32 %v627, %v703
        %v705 = vadd.f32 %v590, %v692
        %v706 = vlaneseq
        %v707 = vshrl.u32 %v706, 7
        %v708 = vsub.s32 0, %v707
        %v709 = vrot.slane %v705, %v708
        %v710 = vmin.f32 %v635, %v709
        %v711 = vlaneseq
        %v712 = vshrl.u32 %v711, 7
        %v713 = vsub.s32 1, %v712
        %v714 = vrot.slane %v705, %v713
        %v715 = vmin.f32 %v641, %v714
        %vm716 = vcmp.lt.f32.partialorder %v699, %v710
        %vm717 = vcmp.lt.f32.partialorder %v704, %v715
        %vm718 = vmand %vm716, %vm717
        %v719 = vsel %vm718, 1, 0
        %v720 = vcvt.s32.f32 %v719
        %v721 = vsub.f32 %v710, %v699
        %v722 = vsub.f32 %v715, %v704
        %v723 = vmul.f32 %v721, %v722
        %v724 = vmul.f32 %v723, %v720
        %725 = vrot.lane.b32.xlu0 %v575, 127
        %v726 = vpop.permute.xlu0 %725
        %v728 = vmul.f32 %v575, %v726
        %v730 = vrot.slane %v593, 1
        %v732 = vmul.f32 %v593, %v730
        %734 = vset.pattern.permute.xlu0 2
        %735 = vperm.xlu0 %734, %v728
        %v736 = vpop.permute.xlu0 %735
        %v738 = vlaneseq
        %v739 = vshrl.u32 %v738, 7
        %v740 = vsub.s32 2, %v739
        %v741 = vrot.slane %v732, %v740
        %v742 = vadd.f32 %v736, %v741
        %v743 = vsub.f32 %v742, %v724
        %v744 = vadd.f32 %v743, 1e-09
        %v745 = vrcp.pop %v744
        %v746 = vmul.f32 %v744, %v745
        %v747 = vsub.f32 2.0, %v746
        %v748 = vmul.f32 %v745, %v747
        %v749 = vmul.f32 %v724, %v748
        %750 = vst [vmem:[%s528] sm:$0xff] %v749
        %v751 = vadd.f32 %v749, 1e-08
        %v752 = vlog2.pop %v751
        %v753 = vmul.f32 %v752, 0.6931472
        %v754 = vsub.f32 0.0, %v753
        %v755 = vxor.u32 %v581, 2147483648
        %v756 = vmul.f32 %v755, 1.442695
        %v757 = vpow.pop %v756
        %v758 = vadd.f32 %v757, 1.0
        %v759 = vrcp.pop %v758
        %v760 = vmul.f32 1.0, %v759
        %v761 = vxor.u32 %v582, 2147483648
        %v762 = vmul.f32 %v761, 1.442695
        %v763 = vpow.pop %v762
        %v764 = vadd.f32 %v763, 1.0
        %v765 = vrcp.pop %v764
        %v766 = vmul.f32 1.0, %v765
        %v768 = vlaneseq
        %v769 = vshrl.u32 %v768, 7
        %v770 = vsub.s32 0, %v769
        %v771 = vrot.slane %v766, %v770
        %v773 = vmul.f32 %v760, %v771
        %v774 = vrsqrt.pop %v773
        %v775 = vmul.f32 %v773, %v774
        %vm776 = vcmp.eq.f32.partialorder %v773, inf
        %v777 = vsel %vm776, %v773, %v775
        %vm778 = vcmp.eq.f32.partialorder %v773, 0.0
        %v779 = vand.u32 %v773, 2147483648
        %v780 = vsel %vm778, %v779, %v777
        %v781 = vlog2.pop %v780
        %v782 = vmul.f32 %v781, 0.6931472
        %v783 = vmax.f32 %v782, -100.0
        %v784 = vsub.f32 1.0, %v780
        %v785 = vlog2.pop %v784
        %v786 = vmul.f32 %v785, 0.6931472
        %v787 = vmax.f32 %v786, -100.0
        %v788 = vsub.f32 %v783, %v787
        %vm789 = vcmask 1042432
        %v790 = vsel %vm789, %v787, 0.0
        %v791 = vrot.slane %v790, 4
        %v792 = vadd.f32 %v790, %v791
        %v793 = vrot.slane %v792, 2
        %v794 = vadd.f32 %v792, %v793
        %v795 = vrot.slane %v794, 1
        %v796 = vadd.f32 %v794, %v795
        %v797 = vld [vmem:[%s543] sm:$0xff]
        %vm798 = vcmask 23552
        %v800 = vsel %vm798, %v797, 0
        %v803 = vsel %vm789, %v788, 0
        %805 = vmatprep.subr.mxu0 0.0
        %806 = vmatpush1.msra.mxu0 %v803
        %807 = vmatprep.subr.mxu0 0.0
        %808 = vmatpush1.msra.mxu0 0.0
        %809 = vmatprep.subr.mxu0 0.0
        %810 = vmatpush1.msra.mxu0 0.0
        %811 = vmatprep.subr.mxu0 0.0
        %812 = vmatpush1.msra.mxu0 0.0
        %813 = vmatprep.subr.mxu0 0.0
        %814 = vmatpush1.msra.mxu0 0.0
        %815 = vmatprep.subr.mxu0 0.0
        %816 = vmatpush1.msra.mxu0 0.0
        %817 = vmatprep.subr.mxu0 0.0
        %818 = vmatpush1.msra.mxu0 0.0
        %819 = vmatprep.subr.mxu0 0.0
        %820 = vmatpush1.msra.mxu0 0.0
        %821 = vmatprep.subr.mxu0 0.0
        %822 = vmatpush1.msra.mxu0 0.0
        %823 = vmatprep.subr.mxu0 0.0
        %824 = vmatpush1.msra.mxu0 0.0
        %825 = vmatprep.subr.mxu0 0.0
        %826 = vmatpush1.msra.mxu0 0.0
        %827 = vmatprep.subr.mxu0 0.0
        %828 = vmatpush1.msra.mxu0 0.0
        %829 = vmatprep.subr.mxu0 0.0
        %830 = vmatpush1.msra.mxu0 0.0
        %831 = vmatprep.subr.mxu0 0.0
        %832 = vmatpush1.msra.mxu0 0.0
        %833 = vmatprep.subr.mxu0 0.0
        %834 = vmatpush1.msra.mxu0 0.0
        %835 = vmatprep.subr.mxu0 0.0
        %836 = vmatpush1.msra.mxu0 0.0
        %837 = vmatprep.subr.mxu0 0.0
        %838 = vmatpush1.msra.mxu0 0.0
        %839 = vmatprep.subr.mxu0 0.0
        %840 = vmatpush1.msra.mxu0 0.0
        %841 = vmatprep.subr.mxu0 0.0
        %842 = vmatpush1.msra.mxu0 0.0
        %843 = vmatprep.subr.mxu0 0.0
        %844 = vmatpush1.msra.mxu0 0.0
        %845 = vmatprep.subr.mxu0 0.0
        %846 = vmatpush1.msra.mxu0 0.0
        %847 = vmatprep.subr.mxu0 0.0
        %848 = vmatpush1.msra.mxu0 0.0
        %849 = vmatprep.subr.mxu0 0.0
        %850 = vmatpush1.msra.mxu0 0.0
        %851 = vmatprep.subr.mxu0 0.0
        %852 = vmatpush1.msra.mxu0 0.0
        %853 = vmatprep.subr.mxu0 0.0
        %854 = vmatpush1.msra.mxu0 0.0
        %855 = vmatprep.subr.mxu0 0.0
        %856 = vmatpush1.msra.mxu0 0.0
        %857 = vmatprep.subr.mxu0 0.0
        %858 = vmatpush1.msra.mxu0 0.0
        %859 = vmatprep.subr.mxu0 0.0
        %860 = vmatpush1.msra.mxu0 0.0
        %861 = vmatprep.subr.mxu0 0.0
        %862 = vmatpush1.msra.mxu0 0.0
        %863 = vmatprep.subr.mxu0 0.0
        %864 = vmatpush1.msra.mxu0 0.0
        %865 = vmatprep.subr.mxu0 0.0
        %866 = vmatpush1.msra.mxu0 0.0
        %867 = vmatprep.subr.mxu0 0.0
        %868 = vmatpush1.msra.mxu0 0.0
        %869 = vmatprep.mubr.f32.mxu0 0.0
        %870 = vmatmul.mubr.f32.gmra.mrb[0].mxu0 %v800
        %v871 = vpop.f32.mrb[0].mxu0
        %v872 = vadd.f32 %v796, %v871
        %v873 = vpop.f32.mrb[0].mxu0
        %874 = vdwg.mxu0
        %v875 = vsub.f32 0.0, %v872
        %v876 = vmul.f32 %v754, 3.0
        %v877 = vadd.f32 %v875, %v876
        %v878 = vsub.f32 1.0, %v679
        %v879 = vmul.f32 %v878, 100000.0
        %v880 = vadd.f32 %v877, %v879
        %881 = vst [vmem:[%s535] sm:$0xff] %v880
        %s882 = sand.u32 %s268, 1
        %s883 = scalar_lea.sflag [#allocation3], %s882
        %s884 = sand.u32 %s268, 1
        %s885 = smul.addr %s884, 4
        %s886 = scalar_lea.vmem [#allocation2], %s885
        %s887 = sand.u32 %s32, 1
        %s888 = scalar_lea.sflag [#allocation5], %s887
        %s889 = sand.u32 %s296, 1
        %s890 = scalar_lea.vmem [#allocation4], %s889
        %s891 = sand.u32 %s32, 1
        %s892 = scalar_lea.sflag [#allocation5], %s891
        %s893 = sand.u32 %s324, 1
        %s894 = smul.addr %s893, 8
        %s895 = scalar_lea.vmem [#allocation6], %s894
        %s896 = sand.u32 %s352, 1
        %s897 = scalar_lea.sflag [#allocation8], %s896
        %s898 = sand.u32 %s352, 1
        %s899 = smul.addr %s898, 8
        %s900 = scalar_lea.vmem [#allocation7], %s899
        // Predicated region
        $region53: #{tpu_custom_call.1} parent=51 // pred_check
          %p901 = pneg %p278
        $region54: #{tpu_custom_call.1} parent=51 // pred_check_branch
          %903 = sbr.rel (%p901) target = $region56
        $region55: #{tpu_custom_call.1} parent=51 // pred_region
          %s905 = ssub.s32 64, 64
          %906 = vsyncadd %s883, %s905
          %s907 = sadd.s32 %s37, %s36
          %s908 = smul.addr %s907, 64
          %s909 = scalar_lea.hbm %s8, %s908
          %s911 = sshll.u32 %s886, 4
          %s912 = int_to_ptr.vmem [resolvable:$true] %s911
          %914 = dma.vmem_to_hbm [thread:$0]  %s912, 64, %s909, %s883
        $region56: #{tpu_custom_call.1} parent=51 // pred_fallthru
          _
        // Predicated region
        $region57: #{tpu_custom_call.1} parent=51 // pred_check
          %p915 = pneg %p306
        $region58: #{tpu_custom_call.1} parent=51 // pred_check_branch
          %917 = sbr.rel (%p915) target = $region60
        $region59: #{tpu_custom_call.1} parent=51 // pred_region
          %s919 = ssub.s32 16, 16
          %920 = vsyncadd %s888, %s919
          %s921 = sadd.s32 %s37, %s36
          %s922 = smul.addr %s921, 16
          %s923 = scalar_lea.hbm %s9, %s922
          %s925 = sshll.u32 %s890, 4
          %s926 = int_to_ptr.vmem [resolvable:$true] %s925
          %928 = dma.vmem_to_hbm [thread:$0]  %s926, 16, %s923, %s888
        $region60: #{tpu_custom_call.1} parent=51 // pred_fallthru
          _
        // Predicated region
        $region61: #{tpu_custom_call.1} parent=51 // pred_check
          %p929 = pneg %p334
        $region62: #{tpu_custom_call.1} parent=51 // pred_check_branch
          %931 = sbr.rel (%p929) target = $region64
        $region63: #{tpu_custom_call.1} parent=51 // pred_region
          %s933 = ssub.s32 128, 128
          %934 = vsyncadd %s892, %s933
          %s935 = sadd.s32 %s37, %s36
          %s936 = smul.addr %s935, 128
          %s937 = scalar_lea.hbm %s10, %s936
          %s939 = sshll.u32 %s895, 4
          %s940 = int_to_ptr.vmem [resolvable:$true] %s939
          %942 = dma.vmem_to_hbm [thread:$0]  %s940, 128, %s937, %s892
        $region64: #{tpu_custom_call.1} parent=51 // pred_fallthru
          _
        // Predicated region
        $region65: #{tpu_custom_call.1} parent=51 // pred_check
          %p943 = pneg %p362
        $region66: #{tpu_custom_call.1} parent=51 // pred_check_branch
          %945 = sbr.rel (%p943) target = $region68
        $region67: #{tpu_custom_call.1} parent=51 // pred_region
          %s947 = ssub.s32 128, 128
          %948 = vsyncadd %s897, %s947
          %s949 = sadd.s32 %s37, %s36
          %s950 = smul.addr %s949, 128
          %s951 = scalar_lea.hbm %s11, %s950
          %s953 = sshll.u32 %s900, 4
          %s954 = int_to_ptr.vmem [resolvable:$true] %s953
          %956 = dma.vmem_to_hbm [thread:$0]  %s954, 128, %s951, %s897
        $region68: #{tpu_custom_call.1} parent=51 // pred_fallthru
          _
      $region52: #{tpu_custom_call.1} parent=5 // pred_fallthru
        _
      %p957 = scmp.le.s32.totalorder 2, %s27
      // Predicated region
      $region69: #{tpu_custom_call.1} parent=5 // pred_check
        %p958 = pneg %p957
      $region70: #{tpu_custom_call.1} parent=5 // pred_check_branch
        %960 = sbr.rel (%p958) target = $region72
      $region71: #{tpu_custom_call.1} parent=5 // pred_region
        %s961 = ssub.s32 %s27, 2
        // Predicated region
        $region73: #{tpu_custom_call.1} parent=71 // pred_check
          %p962 = pneg %p284
        $region74: #{tpu_custom_call.1} parent=71 // pred_check_branch
          %964 = sbr.rel (%p962) target = $region76
        $region75: #{tpu_custom_call.1} parent=71 // pred_region
          %s965 = sand.u32 %s269, 1
          %s966 = scalar_lea.sflag [#allocation3], %s965
          %s967 = sand.u32 %s269, 1
          %s968 = smul.addr %s967, 4
          %s969 = scalar_lea.vmem [#allocation2], %s968
          %970 = dma.done %s966, 64
        $region76: #{tpu_custom_call.1} parent=71 // pred_fallthru
          _
        // Predicated region
        $region77: #{tpu_custom_call.1} parent=71 // pred_check
          %p971 = pneg %p312
        $region78: #{tpu_custom_call.1} parent=71 // pred_check_branch
          %973 = sbr.rel (%p971) target = $region80
        $region79: #{tpu_custom_call.1} parent=71 // pred_region
          %s974 = sand.u32 %s33, 1
          %s975 = scalar_lea.sflag [#allocation5], %s974
          %s976 = sand.u32 %s297, 1
          %s977 = scalar_lea.vmem [#allocation4], %s976
          %978 = dma.done %s975, 16
        $region80: #{tpu_custom_call.1} parent=71 // pred_fallthru
          _
        // Predicated region
        $region81: #{tpu_custom_call.1} parent=71 // pred_check
          %p979 = pneg %p340
        $region82: #{tpu_custom_call.1} parent=71 // pred_check_branch
          %981 = sbr.rel (%p979) target = $region84
        $region83: #{tpu_custom_call.1} parent=71 // pred_region
          %s982 = sand.u32 %s33, 1
          %s983 = scalar_lea.sflag [#allocation5], %s982
          %s984 = sand.u32 %s325, 1
          %s985 = smul.addr %s984, 8
          %s986 = scalar_lea.vmem [#allocation6], %s985
          %987 = dma.done %s983, 128
        $region84: #{tpu_custom_call.1} parent=71 // pred_fallthru
          _
        // Predicated region
        $region85: #{tpu_custom_call.1} parent=71 // pred_check
          %p988 = pneg %p368
        $region86: #{tpu_custom_call.1} parent=71 // pred_check_branch
          %990 = sbr.rel (%p988) target = $region88
        $region87: #{tpu_custom_call.1} parent=71 // pred_region
          %s991 = sand.u32 %s353, 1
          %s992 = scalar_lea.sflag [#allocation8], %s991
          %s993 = sand.u32 %s353, 1
          %s994 = smul.addr %s993, 8
          %s995 = scalar_lea.vmem [#allocation7], %s994
          %996 = dma.done %s992, 128
        $region88: #{tpu_custom_call.1} parent=71 // pred_fallthru
          _
      $region72: #{tpu_custom_call.1} parent=5 // pred_fallthru
        _
    $region6: #{tpu_custom_call.1} parent=1 // loop_footer
      %s31 = sadd.s32 1, %s27
    $region7: #{tpu_custom_call.1} parent=1 // loop_footer_branch
      %26 = sbr.rel target = $region3
    $region8: #{tpu_custom_call.1} parent=1 // loop_exit
      _
    %997 = vsyncpa [#allocation3], 1
    %s998 = scalar_lea.sflag [#allocation3], 1
    %999 = vsyncpa %s998, 1
    %1000 = vsyncpa [#allocation5], 1
    %s1001 = scalar_lea.sflag [#allocation5], 1
    %1002 = vsyncpa %s1001, 1
    %1003 = vsyncpa [#allocation8], 1
    %s1004 = scalar_lea.sflag [#allocation8], 1
    %1005 = vsyncpa %s1004, 1

</llo_original>
